<compile_context>
chip_gen: v5e
topology: v5e:2x2
jax: 0.10.0
libtpu: 0.0.40
codegen_flags: <defaults>
</compile_context>

<pallas_src>
import functools

import jax
import jax.numpy as jnp
from jax.experimental import pallas as pl
from jax.experimental.pallas import tpu as pltpu


_STEPS_PER_TILE = 8  # sublane-dense output tile == per-grid-iteration unroll


# ---------------------------------------------------------------------------
# Kernel
# ---------------------------------------------------------------------------
def _encoder_lstm_kernel(gx_ref,        # (8, 4H) f32  precomputed x-gates (+bias) for this tile
                         h0_ref,        # (1, H)  f32  initial hidden state   (VMEM-resident)
                         c0_ref,        # (1, H)  f32  initial cell state     (VMEM-resident)
                         whh_ref,       # (H, 4H)      W_hh^T, cols [i,f,o|g] (VMEM-resident)
                         out_ref,       # (8, H)  f32  h for the 8 steps of this tile
                         c_out_ref,     # (1, H)  f32  final cell state
                         h_sc, c_sc,    # (1, H)  f32  VMEM state carry
                         *, seq_len, hidden_size):
    H = hidden_size
    tile = pl.program_id(0)
    base = tile * _STEPS_PER_TILE

    @pl.when(tile == 0)
    def _init():
        h_sc[...] = h0_ref[...]
        c_sc[...] = c0_ref[...]

    h = h_sc[...]                       # (1, H) f32
    c = c_sc[...]                       # (1, H) f32

    # Fully unrolled 8-step inner loop (tiny fixed trip count, static slices).
    for r in range(_STEPS_PER_TILE):
        valid = base + r < seq_len
        gates = gx_ref[r:r + 1, :] + jnp.dot(
            h.astype(whh_ref.dtype), whh_ref[...],
            preferred_element_type=jnp.float32)              # (1, 4H) f32

        # Gate columns were packed [i, f, o | g]: one sigmoid block, one tanh.
        sig = jax.nn.sigmoid(gates[:, 0:3 * H])
        i_g = sig[:, 0:H]
        f_g = sig[:, H:2 * H]
        o_g = sig[:, 2 * H:3 * H]
        g_g = jnp.tanh(gates[:, 3 * H:4 * H])

        c_new = f_g * c + i_g * g_g
        h_new = o_g * jnp.tanh(c_new)

        # Pad steps (t >= seq_len): write zeros, do not advance the state.
        out_ref[r:r + 1, :] = jnp.where(valid, h_new, 0.0).astype(out_ref.dtype)
        h = jnp.where(valid, h_new, h)
        c = jnp.where(valid, c_new, c)

    h_sc[...] = h
    c_sc[...] = c

    @pl.when(tile == pl.num_programs(0) - 1)
    def _final():
        c_out_ref[...] = c


# ---------------------------------------------------------------------------
# Parameter packing (call ONCE, outside the per-sequence loop)
# ---------------------------------------------------------------------------
def pack_params(params, *, dtype=jnp.bfloat16):
    """Pack PyTorch-layout LSTM params for the kernel.

    Gate columns are reordered [i, f, g, o] -> [i, f, o, g] so the kernel can
    apply one contiguous sigmoid (3H) and one tanh (H).

    Returns:
      emb    : (V, H)   embedding table (dtype)
      w_ih_t : (H, 4H)  W_ih^T, reordered (dtype)   -- used in the jit wrapper
      w_hh_t : (H, 4H)  W_hh^T, reordered (dtype)   -- resident in the kernel
      b      : (1, 4H)  b_ih + b_hh, reordered (f32)
    """
    H = params["w_hh"].shape[1]

    def reorder(m):  # last axis has column blocks [i | f | g | o]
        return jnp.concatenate(
            [m[..., 0:2 * H], m[..., 3 * H:4 * H], m[..., 2 * H:3 * H]], axis=-1)

    return {
        "emb": params["embedding"].astype(dtype),
        "w_ih_t": reorder(params["w_ih"].T).astype(dtype),
        "w_hh_t": reorder(params["w_hh"].T).astype(dtype),
        "b": reorder((params["b_ih"] + params["b_hh"]).reshape(1, -1)
                     ).astype(jnp.float32),
    }


# ---------------------------------------------------------------------------
# Wrappers
# ---------------------------------------------------------------------------
@functools.partial(jax.jit, static_argnames=("hidden_size",))
def encoder_rnn_encode(tokens, hidden, context, packed, *, hidden_size):
    """Run the encoder LSTM over a whole token sequence with one pallas_call.

    tokens  : (T,) int32 token ids (T >= 1)
    hidden  : (1, 1, H) initial hidden state
    context : (1, 1, H) initial cell state
    returns : (outputs (T, 1, H), (hidden (1, 1, H), context (1, 1, H)))
    """
    H = hidden_size
    tokens = jnp.asarray(tokens, jnp.int32).reshape(-1)
    T = tokens.shape[0]
    T_pad = ((T + _STEPS_PER_TILE - 1) // _STEPS_PER_TILE) * _STEPS_PER_TILE
    num_tiles = T_pad // _STEPS_PER_TILE
    tok_pad = jnp.pad(tokens, (0, T_pad - T))

    # Non-recurrent half of the gates, hoisted out of the recurrence:
    # one dense (T_pad, H) @ (H, 4H) matmul at full MXU efficiency (via XLA).
    x = jnp.take(packed["emb"], tok_pad, axis=0)                        # (T_pad, H)
    gx = jnp.dot(x, packed["w_ih_t"],
                 preferred_element_type=jnp.float32,
                 precision=jax.lax.Precision.HIGHEST) + packed["b"]     # (T_pad, 4H)

    h0 = hidden.reshape(1, H).astype(jnp.float32)
    c0 = context.reshape(1, H).astype(jnp.float32)

    kernel = functools.partial(_encoder_lstm_kernel, seq_len=T, hidden_size=H)

    grid_spec = pltpu.PrefetchScalarGridSpec(
        num_scalar_prefetch=0,
        grid=(num_tiles,),
        in_specs=[
            pl.BlockSpec((_STEPS_PER_TILE, 4 * H), lambda i: (i, 0)),   # gx streamed
            pl.BlockSpec((1, H), lambda i: (0, 0)),                     # h0 (resident)
            pl.BlockSpec((1, H), lambda i: (0, 0)),                     # c0 (resident)
            pl.BlockSpec((H, 4 * H), lambda i: (0, 0)),                 # W_hh^T (resident)
        ],
        out_specs=[
            pl.BlockSpec((_STEPS_PER_TILE, H), lambda i: (i, 0)),       # h per step
            pl.BlockSpec((1, H), lambda i: (0, 0)),                     # final c
        ],
        scratch_shapes=[
            pltpu.VMEM((1, H), jnp.float32),   # h carry
            pltpu.VMEM((1, H), jnp.float32),   # c carry
        ],
    )

    out_seq, c_fin = pl.pallas_call(
        kernel,
        grid_spec=grid_spec,
        out_shape=(
            jax.ShapeDtypeStruct((T_pad, H), jnp.float32),
            jax.ShapeDtypeStruct((1, H), jnp.float32),
        ),
        compiler_params=pltpu.CompilerParams(
            dimension_semantics=("arbitrary",)),    # recurrence: sequential grid
    )(gx, h0, c0, packed["w_hh_t"])

    outputs = out_seq[:T].reshape(T, 1, H)
    h_fin = out_seq[T - 1].reshape(1, 1, H)         # final hidden == last output row
    return outputs, (h_fin, c_fin.reshape(1, 1, H))


def encoder_rnn_forward(token, hidden, context, packed, *, hidden_size):
    """Single-step API matching EncoderRNN.forward(input, hidden, context)."""
    tok = jnp.asarray(token, jnp.int32).reshape(1)
    outputs, (h, c) = encoder_rnn_encode(tok, hidden, context, packed,
                                         hidden_size=hidden_size)
    return outputs.reshape(1, 1, hidden_size), (h, c)


# ---------------------------------------------------------------------------
# Pure-JAX reference (torch.nn.LSTM semantics, gate order [i, f, g, o]).
# `dtype` mirrors the kernel's weight/embedding/recurrent-operand quantization.
# ---------------------------------------------------------------------------
def _reference_encode(tokens, hidden, context, params, hidden_size,
                      dtype=jnp.float32):
    H = hidden_size
    q = lambda a: a.astype(dtype).astype(jnp.float32)
    emb = q(params["embedding"])
    w_ih = q(params["w_ih"])
    w_hh = q(params["w_hh"])
    b = (params["b_ih"] + params["b_hh"]).astype(jnp.float32)
    hp = jax.lax.Precision.HIGHEST
    h = hidden.reshape(1, H).astype(jnp.float32)
    c = context.reshape(1, H).astype(jnp.float32)
    outs = []
    for t in range(int(tokens.shape[0])):
        x = emb[int(tokens[t])].reshape(1, H)
        gates = (jnp.dot(x, w_ih.T, precision=hp)
                 + jnp.dot(q(h), w_hh.T, precision=hp) + b)
        i = jax.nn.sigmoid(gates[:, 0:H])
        f = jax.nn.sigmoid(gates[:, H:2 * H])
        g = jnp.tanh(gates[:, 2 * H:3 * H])
        o = jax.nn.sigmoid(gates[:, 3 * H:4 * H])
        c = f * c + i * g
        h = o * jnp.tanh(c)
        outs.append(h)
    outputs = jnp.stack(outs, axis=0)               # (T, 1, H)
    return outputs, (h.reshape(1, 1, H), c.reshape(1, 1, H))


def init_params(key, input_size, hidden_size):
    """Deterministic synthetic parameters (PyTorch-style layouts)."""
    H = hidden_size
    k_emb, k_wih, k_whh, k_bih, k_bhh = jax.random.split(key, 5)
    bound = 1.0 / (H ** 0.5)
    return {
        "embedding": jax.random.normal(k_emb, (input_size, H), jnp.float32),
        "w_ih": jax.random.uniform(k_wih, (4 * H, H), jnp.float32, -bound, bound),
        "w_hh": jax.random.uniform(k_whh, (4 * H, H), jnp.float32, -bound, bound),
        "b_ih": jax.random.uniform(k_bih, (4 * H,), jnp.float32, -bound, bound),
        "b_hh": jax.random.uniform(k_bhh, (4 * H,), jnp.float32, -bound, bound),
    }


if __name__ == "__main__":
    INPUT_SIZE = 64      # vocabulary size
    HIDDEN_SIZE = 128    # hidden units (lane-aligned)
    SEQ_LEN = 11         # deliberately not a multiple of 8 to exercise padding

    key = jax.random.PRNGKey(0)
    k_params, k_tok, k_h, k_c = jax.random.split(key, 4)

    params = init_params(k_params, INPUT_SIZE, HIDDEN_SIZE)
    tokens = jax.random.randint(k_tok, (SEQ_LEN,), 0, INPUT_SIZE, dtype=jnp.int32)
    hidden = jax.random.normal(k_h, (1, 1, HIDDEN_SIZE), jnp.float32)
    context = jax.random.normal(k_c, (1, 1, HIDDEN_SIZE), jnp.float32)

    # ---- f32-weight path: check against PyTorch-semantics reference ----
    packed_f32 = pack_params(params, dtype=jnp.float32)
    out_f32, (h_f32, c_f32) = encoder_rnn_encode(
        tokens, hidden, context, packed_f32, hidden_size=HIDDEN_SIZE)
    jax.block_until_ready((out_f32, h_f32, c_f32))

    ref_out, (ref_h, ref_c) = _reference_encode(
        tokens, hidden, context, params, HIDDEN_SIZE, dtype=jnp.float32)

    assert out_f32.shape == (SEQ_LEN, 1, HIDDEN_SIZE)
    assert h_f32.shape == (1, 1, HIDDEN_SIZE) and c_f32.shape == (1, 1, HIDDEN_SIZE)
    assert jnp.allclose(out_f32, ref_out, atol=1e-3, rtol=1e-3)
    assert jnp.allclose(h_f32, ref_h, atol=1e-3, rtol=1e-3)
    assert jnp.allclose(c_f32, ref_c, atol=1e-3, rtol=1e-3)

    # ---- bf16-weight path (perf configuration) ----
    packed_bf16 = pack_params(params, dtype=jnp.bfloat16)
    out_bf, (h_bf, c_bf) = encoder_rnn_encode(
        tokens, hidden, context, packed_bf16, hidden_size=HIDDEN_SIZE)
    jax.block_until_ready((out_bf, h_bf, c_bf))

    ref_out_bf, (ref_h_bf, ref_c_bf) = _reference_encode(
        tokens, hidden, context, params, HIDDEN_SIZE, dtype=jnp.bfloat16)
    assert jnp.allclose(out_bf, ref_out_bf, atol=5e-3, rtol=5e-3)
    assert jnp.allclose(h_bf, ref_h_bf, atol=5e-3, rtol=5e-3)
    assert jnp.allclose(c_bf, ref_c_bf, atol=5e-3, rtol=5e-3)
    # loose sanity vs the full-f32 reference (bf16 weight quantization error)
    assert jnp.allclose(out_bf, ref_out, atol=1e-1)

    # ---- single-step API matching the original EncoderRNN.forward ----
    step_out, (step_h, step_c) = encoder_rnn_forward(
        tokens[0], hidden, context, packed_f32, hidden_size=HIDDEN_SIZE)
    jax.block_until_ready((step_out, step_h, step_c))
    assert step_out.shape == (1, 1, HIDDEN_SIZE)
    assert jnp.allclose(step_out, ref_out[0:1], atol=1e-3, rtol=1e-3)
    assert jnp.allclose(step_h, ref_out[0:1], atol=1e-3, rtol=1e-3)

    print("KERNEL_OK")
</pallas_src>

<mosaic_0001>
module attributes {stable_mosaic.version = 11 : i64} {
  func.func @_encoder_lstm_kernel(%arg0: i32, %arg1: memref<8x512xf32, #tpu.memory_space<vmem>>, %arg2: memref<1x128xf32, #tpu.memory_space<vmem>>, %arg3: memref<1x128xf32, #tpu.memory_space<vmem>>, %arg4: memref<128x512xf32, #tpu.memory_space<vmem>>, %arg5: memref<8x128xf32, #tpu.memory_space<vmem>>, %arg6: memref<1x128xf32, #tpu.memory_space<vmem>>, %arg7: memref<1x128xf32, #tpu.memory_space<vmem>>, %arg8: memref<1x128xf32, #tpu.memory_space<vmem>>) attributes {dimension_semantics = [#tpu.dimension_semantics<arbitrary>], iteration_bounds = array<i64: 2>, scalar_prefetch = 0 : i64, scratch_operands = 2 : i64, tpu.core_type = #tpu.core_type<tc>, window_params = [{transform_indices = @transform_0, window_bounds = array<i64: 8, 512>}, {pipeline_mode = #tpu.pipeline_mode<synchronous>, transform_indices = @transform_1, window_bounds = array<i64: 1, 128>}, {pipeline_mode = #tpu.pipeline_mode<synchronous>, transform_indices = @transform_2, window_bounds = array<i64: 1, 128>}, {pipeline_mode = #tpu.pipeline_mode<synchronous>, transform_indices = @transform_3, window_bounds = array<i64: 128, 512>}, {transform_indices = @transform_4, window_bounds = array<i64: 8, 128>}, {pipeline_mode = #tpu.pipeline_mode<synchronous>, transform_indices = @transform_5, window_bounds = array<i64: 1, 128>}]} {
    %c8_i32 = arith.constant 8 : i32
    %0 = arith.muli %arg0, %c8_i32 : i32
    %c0_i32 = arith.constant 0 : i32
    %1 = arith.cmpi eq, %arg0, %c0_i32 : i32
    %2 = arith.extui %1 : i1 to i32
    %c0_i32_0 = arith.constant 0 : i32
    %3 = arith.cmpi ne, %2, %c0_i32_0 : i32
    scf.if %3 {
      %c0_82 = arith.constant 0 : index
      %c0_83 = arith.constant 0 : index
      %227 = vector.load %arg2[%c0_82, %c0_83] : memref<1x128xf32, #tpu.memory_space<vmem>>, vector<1x128xf32>
      %c0_84 = arith.constant 0 : index
      %c0_85 = arith.constant 0 : index
      %228 = vector.load %arg7[%c0_84, %c0_85] : memref<1x128xf32, #tpu.memory_space<vmem>>, vector<1x128xf32>
      tpu.vector_store %arg7[%c0_84, %c0_85], %227 {strides = array<i32>} : memref<1x128xf32, #tpu.memory_space<vmem>>, vector<1x128xf32>,
      %c0_86 = arith.constant 0 : index
      %c0_87 = arith.constant 0 : index
      %229 = vector.load %arg3[%c0_86, %c0_87] : memref<1x128xf32, #tpu.memory_space<vmem>>, vector<1x128xf32>
      %c0_88 = arith.constant 0 : index
      %c0_89 = arith.constant 0 : index
      %230 = vector.load %arg8[%c0_88, %c0_89] : memref<1x128xf32, #tpu.memory_space<vmem>>, vector<1x128xf32>
      tpu.vector_store %arg8[%c0_88, %c0_89], %229 {strides = array<i32>} : memref<1x128xf32, #tpu.memory_space<vmem>>, vector<1x128xf32>,
    } else {
    }
    %c0 = arith.constant 0 : index
    %c0_1 = arith.constant 0 : index
    %4 = vector.load %arg7[%c0, %c0_1] : memref<1x128xf32, #tpu.memory_space<vmem>>, vector<1x128xf32>
    %c0_2 = arith.constant 0 : index
    %c0_3 = arith.constant 0 : index
    %5 = vector.load %arg8[%c0_2, %c0_3] : memref<1x128xf32, #tpu.memory_space<vmem>>, vector<1x128xf32>
    %c0_i32_4 = arith.constant 0 : i32
    %6 = arith.addi %0, %c0_i32_4 : i32
    %c11_i32 = arith.constant 11 : i32
    %7 = arith.cmpi slt, %6, %c11_i32 : i32
    %c0_5 = arith.constant 0 : index
    %c0_6 = arith.constant 0 : index
    %8 = vector.load %arg1[%c0_5, %c0_6] : memref<8x512xf32, #tpu.memory_space<vmem>>, vector<1x512xf32>
    %c0_7 = arith.constant 0 : index
    %c0_8 = arith.constant 0 : index
    %9 = vector.load %arg4[%c0_7, %c0_8] : memref<128x512xf32, #tpu.memory_space<vmem>>, vector<128x512xf32>
    %cst = arith.constant dense<0.000000e+00> : vector<1x512xf32>
    %10 = tpu.matmul %4, %9, %cst {dimension_numbers = #tpu.dot_dimension_numbers<[1], [0], [0], [1], [0, 0, 1, 1], [], []>} : vector<1x128xf32>, vector<128x512xf32>, vector<1x512xf32> -> vector<1x512xf32>
    %11 = arith.addf %8, %10 : vector<1x512xf32>
    %12 = vector.extract_strided_slice %11 {offsets = [0, 0], sizes = [1, 384], strides = [1, 1]} : vector<1x512xf32> to vector<1x384xf32>
    %13 = arith.negf %12 : vector<1x384xf32>
    %14 = math.exp %13 : vector<1x384xf32>
    %cst_9 = arith.constant 1.000000e+00 : f32
    %15 = vector.broadcast %cst_9 : f32 to vector<1x384xf32>
    %16 = arith.addf %15, %14 : vector<1x384xf32>
    %17 = arith.divf %15, %16 : vector<1x384xf32>
    %18 = vector.extract_strided_slice %17 {offsets = [0, 0], sizes = [1, 128], strides = [1, 1]} : vector<1x384xf32> to vector<1x128xf32>
    %19 = vector.extract_strided_slice %17 {offsets = [0, 128], sizes = [1, 128], strides = [1, 1]} : vector<1x384xf32> to vector<1x128xf32>
    %20 = vector.extract_strided_slice %17 {offsets = [0, 256], sizes = [1, 128], strides = [1, 1]} : vector<1x384xf32> to vector<1x128xf32>
    %21 = vector.extract_strided_slice %11 {offsets = [0, 384], sizes = [1, 128], strides = [1, 1]} : vector<1x512xf32> to vector<1x128xf32>
    %22 = math.tanh %21 : vector<1x128xf32>
    %23 = arith.mulf %19, %5 : vector<1x128xf32>
    %24 = arith.mulf %18, %22 : vector<1x128xf32>
    %25 = arith.addf %23, %24 : vector<1x128xf32>
    %26 = math.tanh %25 : vector<1x128xf32>
    %27 = arith.mulf %20, %26 : vector<1x128xf32>
    %cst_10 = arith.constant 0.000000e+00 : f32
    %28 = vector.broadcast %cst_10 : f32 to vector<1x128xf32>
    %29 = arith.select %7, %27, %28 : vector<1x128xf32>
    %c0_11 = arith.constant 0 : index
    %c0_12 = arith.constant 0 : index
    %30 = vector.load %arg5[%c0_11, %c0_12] : memref<8x128xf32, #tpu.memory_space<vmem>>, vector<1x128xf32>
    tpu.vector_store %arg5[%c0_11, %c0_12], %29 {strides = array<i32>} : memref<8x128xf32, #tpu.memory_space<vmem>>, vector<1x128xf32>,
    %31 = arith.select %7, %27, %4 : vector<1x128xf32>
    %32 = arith.select %7, %25, %5 : vector<1x128xf32>
    %c1_i32 = arith.constant 1 : i32
    %33 = arith.addi %0, %c1_i32 : i32
    %c11_i32_13 = arith.constant 11 : i32
    %34 = arith.cmpi slt, %33, %c11_i32_13 : i32
    %c1 = arith.constant 1 : index
    %c0_14 = arith.constant 0 : index
    %35 = vector.load %arg1[%c1, %c0_14] : memref<8x512xf32, #tpu.memory_space<vmem>>, vector<1x512xf32>
    %c0_15 = arith.constant 0 : index
    %c0_16 = arith.constant 0 : index
    %36 = vector.load %arg4[%c0_15, %c0_16] : memref<128x512xf32, #tpu.memory_space<vmem>>, vector<128x512xf32>
    %cst_17 = arith.constant dense<0.000000e+00> : vector<1x512xf32>
    %37 = tpu.matmul %31, %36, %cst_17 {dimension_numbers = #tpu.dot_dimension_numbers<[1], [0], [0], [1], [0, 0, 1, 1], [], []>} : vector<1x128xf32>, vector<128x512xf32>, vector<1x512xf32> -> vector<1x512xf32>
    %38 = arith.addf %35, %37 : vector<1x512xf32>
    %39 = vector.extract_strided_slice %38 {offsets = [0, 0], sizes = [1, 384], strides = [1, 1]} : vector<1x512xf32> to vector<1x384xf32>
    %40 = arith.negf %39 : vector<1x384xf32>
    %41 = math.exp %40 : vector<1x384xf32>
    %cst_18 = arith.constant 1.000000e+00 : f32
    %42 = vector.broadcast %cst_18 : f32 to vector<1x384xf32>
    %43 = arith.addf %42, %41 : vector<1x384xf32>
    %44 = arith.divf %42, %43 : vector<1x384xf32>
    %45 = vector.extract_strided_slice %44 {offsets = [0, 0], sizes = [1, 128], strides = [1, 1]} : vector<1x384xf32> to vector<1x128xf32>
    %46 = vector.extract_strided_slice %44 {offsets = [0, 128], sizes = [1, 128], strides = [1, 1]} : vector<1x384xf32> to vector<1x128xf32>
    %47 = vector.extract_strided_slice %44 {offsets = [0, 256], sizes = [1, 128], strides = [1, 1]} : vector<1x384xf32> to vector<1x128xf32>
    %48 = vector.extract_strided_slice %38 {offsets = [0, 384], sizes = [1, 128], strides = [1, 1]} : vector<1x512xf32> to vector<1x128xf32>
    %49 = math.tanh %48 : vector<1x128xf32>
    %50 = arith.mulf %46, %32 : vector<1x128xf32>
    %51 = arith.mulf %45, %49 : vector<1x128xf32>
    %52 = arith.addf %50, %51 : vector<1x128xf32>
    %53 = math.tanh %52 : vector<1x128xf32>
    %54 = arith.mulf %47, %53 : vector<1x128xf32>
    %cst_19 = arith.constant 0.000000e+00 : f32
    %55 = vector.broadcast %cst_19 : f32 to vector<1x128xf32>
    %56 = arith.select %34, %54, %55 : vector<1x128xf32>
    %c1_20 = arith.constant 1 : index
    %c0_21 = arith.constant 0 : index
    %57 = vector.load %arg5[%c1_20, %c0_21] : memref<8x128xf32, #tpu.memory_space<vmem>>, vector<1x128xf32>
    tpu.vector_store %arg5[%c1_20, %c0_21], %56 {strides = array<i32>} : memref<8x128xf32, #tpu.memory_space<vmem>>, vector<1x128xf32>,
    %58 = arith.select %34, %54, %31 : vector<1x128xf32>
    %59 = arith.select %34, %52, %32 : vector<1x128xf32>
    %c2_i32 = arith.constant 2 : i32
    %60 = arith.addi %0, %c2_i32 : i32
    %c11_i32_22 = arith.constant 11 : i32
    %61 = arith.cmpi slt, %60, %c11_i32_22 : i32
    %c2 = arith.constant 2 : index
    %c0_23 = arith.constant 0 : index
    %62 = vector.load %arg1[%c2, %c0_23] : memref<8x512xf32, #tpu.memory_space<vmem>>, vector<1x512xf32>
    %c0_24 = arith.constant 0 : index
    %c0_25 = arith.constant 0 : index
    %63 = vector.load %arg4[%c0_24, %c0_25] : memref<128x512xf32, #tpu.memory_space<vmem>>, vector<128x512xf32>
    %cst_26 = arith.constant dense<0.000000e+00> : vector<1x512xf32>
    %64 = tpu.matmul %58, %63, %cst_26 {dimension_numbers = #tpu.dot_dimension_numbers<[1], [0], [0], [1], [0, 0, 1, 1], [], []>} : vector<1x128xf32>, vector<128x512xf32>, vector<1x512xf32> -> vector<1x512xf32>
    %65 = arith.addf %62, %64 : vector<1x512xf32>
    %66 = vector.extract_strided_slice %65 {offsets = [0, 0], sizes = [1, 384], strides = [1, 1]} : vector<1x512xf32> to vector<1x384xf32>
    %67 = arith.negf %66 : vector<1x384xf32>
    %68 = math.exp %67 : vector<1x384xf32>
    %cst_27 = arith.constant 1.000000e+00 : f32
    %69 = vector.broadcast %cst_27 : f32 to vector<1x384xf32>
    %70 = arith.addf %69, %68 : vector<1x384xf32>
    %71 = arith.divf %69, %70 : vector<1x384xf32>
    %72 = vector.extract_strided_slice %71 {offsets = [0, 0], sizes = [1, 128], strides = [1, 1]} : vector<1x384xf32> to vector<1x128xf32>
    %73 = vector.extract_strided_slice %71 {offsets = [0, 128], sizes = [1, 128], strides = [1, 1]} : vector<1x384xf32> to vector<1x128xf32>
    %74 = vector.extract_strided_slice %71 {offsets = [0, 256], sizes = [1, 128], strides = [1, 1]} : vector<1x384xf32> to vector<1x128xf32>
    %75 = vector.extract_strided_slice %65 {offsets = [0, 384], sizes = [1, 128], strides = [1, 1]} : vector<1x512xf32> to vector<1x128xf32>
    %76 = math.tanh %75 : vector<1x128xf32>
    %77 = arith.mulf %73, %59 : vector<1x128xf32>
    %78 = arith.mulf %72, %76 : vector<1x128xf32>
    %79 = arith.addf %77, %78 : vector<1x128xf32>
    %80 = math.tanh %79 : vector<1x128xf32>
    %81 = arith.mulf %74, %80 : vector<1x128xf32>
    %cst_28 = arith.constant 0.000000e+00 : f32
    %82 = vector.broadcast %cst_28 : f32 to vector<1x128xf32>
    %83 = arith.select %61, %81, %82 : vector<1x128xf32>
    %c2_29 = arith.constant 2 : index
    %c0_30 = arith.constant 0 : index
    %84 = vector.load %arg5[%c2_29, %c0_30] : memref<8x128xf32, #tpu.memory_space<vmem>>, vector<1x128xf32>
    tpu.vector_store %arg5[%c2_29, %c0_30], %83 {strides = array<i32>} : memref<8x128xf32, #tpu.memory_space<vmem>>, vector<1x128xf32>,
    %85 = arith.select %61, %81, %58 : vector<1x128xf32>
    %86 = arith.select %61, %79, %59 : vector<1x128xf32>
    %c3_i32 = arith.constant 3 : i32
    %87 = arith.addi %0, %c3_i32 : i32
    %c11_i32_31 = arith.constant 11 : i32
    %88 = arith.cmpi slt, %87, %c11_i32_31 : i32
    %c3 = arith.constant 3 : index
    %c0_32 = arith.constant 0 : index
    %89 = vector.load %arg1[%c3, %c0_32] : memref<8x512xf32, #tpu.memory_space<vmem>>, vector<1x512xf32>
    %c0_33 = arith.constant 0 : index
    %c0_34 = arith.constant 0 : index
    %90 = vector.load %arg4[%c0_33, %c0_34] : memref<128x512xf32, #tpu.memory_space<vmem>>, vector<128x512xf32>
    %cst_35 = arith.constant dense<0.000000e+00> : vector<1x512xf32>
    %91 = tpu.matmul %85, %90, %cst_35 {dimension_numbers = #tpu.dot_dimension_numbers<[1], [0], [0], [1], [0, 0, 1, 1], [], []>} : vector<1x128xf32>, vector<128x512xf32>, vector<1x512xf32> -> vector<1x512xf32>
    %92 = arith.addf %89, %91 : vector<1x512xf32>
    %93 = vector.extract_strided_slice %92 {offsets = [0, 0], sizes = [1, 384], strides = [1, 1]} : vector<1x512xf32> to vector<1x384xf32>
    %94 = arith.negf %93 : vector<1x384xf32>
    %95 = math.exp %94 : vector<1x384xf32>
    %cst_36 = arith.constant 1.000000e+00 : f32
    %96 = vector.broadcast %cst_36 : f32 to vector<1x384xf32>
    %97 = arith.addf %96, %95 : vector<1x384xf32>
    %98 = arith.divf %96, %97 : vector<1x384xf32>
    %99 = vector.extract_strided_slice %98 {offsets = [0, 0], sizes = [1, 128], strides = [1, 1]} : vector<1x384xf32> to vector<1x128xf32>
    %100 = vector.extract_strided_slice %98 {offsets = [0, 128], sizes = [1, 128], strides = [1, 1]} : vector<1x384xf32> to vector<1x128xf32>
    %101 = vector.extract_strided_slice %98 {offsets = [0, 256], sizes = [1, 128], strides = [1, 1]} : vector<1x384xf32> to vector<1x128xf32>
    %102 = vector.extract_strided_slice %92 {offsets = [0, 384], sizes = [1, 128], strides = [1, 1]} : vector<1x512xf32> to vector<1x128xf32>
    %103 = math.tanh %102 : vector<1x128xf32>
    %104 = arith.mulf %100, %86 : vector<1x128xf32>
    %105 = arith.mulf %99, %103 : vector<1x128xf32>
    %106 = arith.addf %104, %105 : vector<1x128xf32>
    %107 = math.tanh %106 : vector<1x128xf32>
    %108 = arith.mulf %101, %107 : vector<1x128xf32>
    %cst_37 = arith.constant 0.000000e+00 : f32
    %109 = vector.broadcast %cst_37 : f32 to vector<1x128xf32>
    %110 = arith.select %88, %108, %109 : vector<1x128xf32>
    %c3_38 = arith.constant 3 : index
    %c0_39 = arith.constant 0 : index
    %111 = vector.load %arg5[%c3_38, %c0_39] : memref<8x128xf32, #tpu.memory_space<vmem>>, vector<1x128xf32>
    tpu.vector_store %arg5[%c3_38, %c0_39], %110 {strides = array<i32>} : memref<8x128xf32, #tpu.memory_space<vmem>>, vector<1x128xf32>,
    %112 = arith.select %88, %108, %85 : vector<1x128xf32>
    %113 = arith.select %88, %106, %86 : vector<1x128xf32>
    %c4_i32 = arith.constant 4 : i32
    %114 = arith.addi %0, %c4_i32 : i32
    %c11_i32_40 = arith.constant 11 : i32
    %115 = arith.cmpi slt, %114, %c11_i32_40 : i32
    %c4 = arith.constant 4 : index
    %c0_41 = arith.constant 0 : index
    %116 = vector.load %arg1[%c4, %c0_41] : memref<8x512xf32, #tpu.memory_space<vmem>>, vector<1x512xf32>
    %c0_42 = arith.constant 0 : index
    %c0_43 = arith.constant 0 : index
    %117 = vector.load %arg4[%c0_42, %c0_43] : memref<128x512xf32, #tpu.memory_space<vmem>>, vector<128x512xf32>
    %cst_44 = arith.constant dense<0.000000e+00> : vector<1x512xf32>
    %118 = tpu.matmul %112, %117, %cst_44 {dimension_numbers = #tpu.dot_dimension_numbers<[1], [0], [0], [1], [0, 0, 1, 1], [], []>} : vector<1x128xf32>, vector<128x512xf32>, vector<1x512xf32> -> vector<1x512xf32>
    %119 = arith.addf %116, %118 : vector<1x512xf32>
    %120 = vector.extract_strided_slice %119 {offsets = [0, 0], sizes = [1, 384], strides = [1, 1]} : vector<1x512xf32> to vector<1x384xf32>
    %121 = arith.negf %120 : vector<1x384xf32>
    %122 = math.exp %121 : vector<1x384xf32>
    %cst_45 = arith.constant 1.000000e+00 : f32
    %123 = vector.broadcast %cst_45 : f32 to vector<1x384xf32>
    %124 = arith.addf %123, %122 : vector<1x384xf32>
    %125 = arith.divf %123, %124 : vector<1x384xf32>
    %126 = vector.extract_strided_slice %125 {offsets = [0, 0], sizes = [1, 128], strides = [1, 1]} : vector<1x384xf32> to vector<1x128xf32>
    %127 = vector.extract_strided_slice %125 {offsets = [0, 128], sizes = [1, 128], strides = [1, 1]} : vector<1x384xf32> to vector<1x128xf32>
    %128 = vector.extract_strided_slice %125 {offsets = [0, 256], sizes = [1, 128], strides = [1, 1]} : vector<1x384xf32> to vector<1x128xf32>
    %129 = vector.extract_strided_slice %119 {offsets = [0, 384], sizes = [1, 128], strides = [1, 1]} : vector<1x512xf32> to vector<1x128xf32>
    %130 = math.tanh %129 : vector<1x128xf32>
    %131 = arith.mulf %127, %113 : vector<1x128xf32>
    %132 = arith.mulf %126, %130 : vector<1x128xf32>
    %133 = arith.addf %131, %132 : vector<1x128xf32>
    %134 = math.tanh %133 : vector<1x128xf32>
    %135 = arith.mulf %128, %134 : vector<1x128xf32>
    %cst_46 = arith.constant 0.000000e+00 : f32
    %136 = vector.broadcast %cst_46 : f32 to vector<1x128xf32>
    %137 = arith.select %115, %135, %136 : vector<1x128xf32>
    %c4_47 = arith.constant 4 : index
    %c0_48 = arith.constant 0 : index
    %138 = vector.load %arg5[%c4_47, %c0_48] : memref<8x128xf32, #tpu.memory_space<vmem>>, vector<1x128xf32>
    tpu.vector_store %arg5[%c4_47, %c0_48], %137 {strides = array<i32>} : memref<8x128xf32, #tpu.memory_space<vmem>>, vector<1x128xf32>,
    %139 = arith.select %115, %135, %112 : vector<1x128xf32>
    %140 = arith.select %115, %133, %113 : vector<1x128xf32>
    %c5_i32 = arith.constant 5 : i32
    %141 = arith.addi %0, %c5_i32 : i32
    %c11_i32_49 = arith.constant 11 : i32
    %142 = arith.cmpi slt, %141, %c11_i32_49 : i32
    %c5 = arith.constant 5 : index
    %c0_50 = arith.constant 0 : index
    %143 = vector.load %arg1[%c5, %c0_50] : memref<8x512xf32, #tpu.memory_space<vmem>>, vector<1x512xf32>
    %c0_51 = arith.constant 0 : index
    %c0_52 = arith.constant 0 : index
    %144 = vector.load %arg4[%c0_51, %c0_52] : memref<128x512xf32, #tpu.memory_space<vmem>>, vector<128x512xf32>
    %cst_53 = arith.constant dense<0.000000e+00> : vector<1x512xf32>
    %145 = tpu.matmul %139, %144, %cst_53 {dimension_numbers = #tpu.dot_dimension_numbers<[1], [0], [0], [1], [0, 0, 1, 1], [], []>} : vector<1x128xf32>, vector<128x512xf32>, vector<1x512xf32> -> vector<1x512xf32>
    %146 = arith.addf %143, %145 : vector<1x512xf32>
    %147 = vector.extract_strided_slice %146 {offsets = [0, 0], sizes = [1, 384], strides = [1, 1]} : vector<1x512xf32> to vector<1x384xf32>
    %148 = arith.negf %147 : vector<1x384xf32>
    %149 = math.exp %148 : vector<1x384xf32>
    %cst_54 = arith.constant 1.000000e+00 : f32
    %150 = vector.broadcast %cst_54 : f32 to vector<1x384xf32>
    %151 = arith.addf %150, %149 : vector<1x384xf32>
    %152 = arith.divf %150, %151 : vector<1x384xf32>
    %153 = vector.extract_strided_slice %152 {offsets = [0, 0], sizes = [1, 128], strides = [1, 1]} : vector<1x384xf32> to vector<1x128xf32>
    %154 = vector.extract_strided_slice %152 {offsets = [0, 128], sizes = [1, 128], strides = [1, 1]} : vector<1x384xf32> to vector<1x128xf32>
    %155 = vector.extract_strided_slice %152 {offsets = [0, 256], sizes = [1, 128], strides = [1, 1]} : vector<1x384xf32> to vector<1x128xf32>
    %156 = vector.extract_strided_slice %146 {offsets = [0, 384], sizes = [1, 128], strides = [1, 1]} : vector<1x512xf32> to vector<1x128xf32>
    %157 = math.tanh %156 : vector<1x128xf32>
    %158 = arith.mulf %154, %140 : vector<1x128xf32>
    %159 = arith.mulf %153, %157 : vector<1x128xf32>
    %160 = arith.addf %158, %159 : vector<1x128xf32>
    %161 = math.tanh %160 : vector<1x128xf32>
    %162 = arith.mulf %155, %161 : vector<1x128xf32>
    %cst_55 = arith.constant 0.000000e+00 : f32
    %163 = vector.broadcast %cst_55 : f32 to vector<1x128xf32>
    %164 = arith.select %142, %162, %163 : vector<1x128xf32>
    %c5_56 = arith.constant 5 : index
    %c0_57 = arith.constant 0 : index
    %165 = vector.load %arg5[%c5_56, %c0_57] : memref<8x128xf32, #tpu.memory_space<vmem>>, vector<1x128xf32>
    tpu.vector_store %arg5[%c5_56, %c0_57], %164 {strides = array<i32>} : memref<8x128xf32, #tpu.memory_space<vmem>>, vector<1x128xf32>,
    %166 = arith.select %142, %162, %139 : vector<1x128xf32>
    %167 = arith.select %142, %160, %140 : vector<1x128xf32>
    %c6_i32 = arith.constant 6 : i32
    %168 = arith.addi %0, %c6_i32 : i32
    %c11_i32_58 = arith.constant 11 : i32
    %169 = arith.cmpi slt, %168, %c11_i32_58 : i32
    %c6 = arith.constant 6 : index
    %c0_59 = arith.constant 0 : index
    %170 = vector.load %arg1[%c6, %c0_59] : memref<8x512xf32, #tpu.memory_space<vmem>>, vector<1x512xf32>
    %c0_60 = arith.constant 0 : index
    %c0_61 = arith.constant 0 : index
    %171 = vector.load %arg4[%c0_60, %c0_61] : memref<128x512xf32, #tpu.memory_space<vmem>>, vector<128x512xf32>
    %cst_62 = arith.constant dense<0.000000e+00> : vector<1x512xf32>
    %172 = tpu.matmul %166, %171, %cst_62 {dimension_numbers = #tpu.dot_dimension_numbers<[1], [0], [0], [1], [0, 0, 1, 1], [], []>} : vector<1x128xf32>, vector<128x512xf32>, vector<1x512xf32> -> vector<1x512xf32>
    %173 = arith.addf %170, %172 : vector<1x512xf32>
    %174 = vector.extract_strided_slice %173 {offsets = [0, 0], sizes = [1, 384], strides = [1, 1]} : vector<1x512xf32> to vector<1x384xf32>
    %175 = arith.negf %174 : vector<1x384xf32>
    %176 = math.exp %175 : vector<1x384xf32>
    %cst_63 = arith.constant 1.000000e+00 : f32
    %177 = vector.broadcast %cst_63 : f32 to vector<1x384xf32>
    %178 = arith.addf %177, %176 : vector<1x384xf32>
    %179 = arith.divf %177, %178 : vector<1x384xf32>
    %180 = vector.extract_strided_slice %179 {offsets = [0, 0], sizes = [1, 128], strides = [1, 1]} : vector<1x384xf32> to vector<1x128xf32>
    %181 = vector.extract_strided_slice %179 {offsets = [0, 128], sizes = [1, 128], strides = [1, 1]} : vector<1x384xf32> to vector<1x128xf32>
    %182 = vector.extract_strided_slice %179 {offsets = [0, 256], sizes = [1, 128], strides = [1, 1]} : vector<1x384xf32> to vector<1x128xf32>
    %183 = vector.extract_strided_slice %173 {offsets = [0, 384], sizes = [1, 128], strides = [1, 1]} : vector<1x512xf32> to vector<1x128xf32>
    %184 = math.tanh %183 : vector<1x128xf32>
    %185 = arith.mulf %181, %167 : vector<1x128xf32>
    %186 = arith.mulf %180, %184 : vector<1x128xf32>
    %187 = arith.addf %185, %186 : vector<1x128xf32>
    %188 = math.tanh %187 : vector<1x128xf32>
    %189 = arith.mulf %182, %188 : vector<1x128xf32>
    %cst_64 = arith.constant 0.000000e+00 : f32
    %190 = vector.broadcast %cst_64 : f32 to vector<1x128xf32>
    %191 = arith.select %169, %189, %190 : vector<1x128xf32>
    %c6_65 = arith.constant 6 : index
    %c0_66 = arith.constant 0 : index
    %192 = vector.load %arg5[%c6_65, %c0_66] : memref<8x128xf32, #tpu.memory_space<vmem>>, vector<1x128xf32>
    tpu.vector_store %arg5[%c6_65, %c0_66], %191 {strides = array<i32>} : memref<8x128xf32, #tpu.memory_space<vmem>>, vector<1x128xf32>,
    %193 = arith.select %169, %189, %166 : vector<1x128xf32>
    %194 = arith.select %169, %187, %167 : vector<1x128xf32>
    %c7_i32 = arith.constant 7 : i32
    %195 = arith.addi %0, %c7_i32 : i32
    %c11_i32_67 = arith.constant 11 : i32
    %196 = arith.cmpi slt, %195, %c11_i32_67 : i32
    %c7 = arith.constant 7 : index
    %c0_68 = arith.constant 0 : index
    %197 = vector.load %arg1[%c7, %c0_68] : memref<8x512xf32, #tpu.memory_space<vmem>>, vector<1x512xf32>
    %c0_69 = arith.constant 0 : index
    %c0_70 = arith.constant 0 : index
    %198 = vector.load %arg4[%c0_69, %c0_70] : memref<128x512xf32, #tpu.memory_space<vmem>>, vector<128x512xf32>
    %cst_71 = arith.constant dense<0.000000e+00> : vector<1x512xf32>
    %199 = tpu.matmul %193, %198, %cst_71 {dimension_numbers = #tpu.dot_dimension_numbers<[1], [0], [0], [1], [0, 0, 1, 1], [], []>} : vector<1x128xf32>, vector<128x512xf32>, vector<1x512xf32> -> vector<1x512xf32>
    %200 = arith.addf %197, %199 : vector<1x512xf32>
    %201 = vector.extract_strided_slice %200 {offsets = [0, 0], sizes = [1, 384], strides = [1, 1]} : vector<1x512xf32> to vector<1x384xf32>
    %202 = arith.negf %201 : vector<1x384xf32>
    %203 = math.exp %202 : vector<1x384xf32>
    %cst_72 = arith.constant 1.000000e+00 : f32
    %204 = vector.broadcast %cst_72 : f32 to vector<1x384xf32>
    %205 = arith.addf %204, %203 : vector<1x384xf32>
    %206 = arith.divf %204, %205 : vector<1x384xf32>
    %207 = vector.extract_strided_slice %206 {offsets = [0, 0], sizes = [1, 128], strides = [1, 1]} : vector<1x384xf32> to vector<1x128xf32>
    %208 = vector.extract_strided_slice %206 {offsets = [0, 128], sizes = [1, 128], strides = [1, 1]} : vector<1x384xf32> to vector<1x128xf32>
    %209 = vector.extract_strided_slice %206 {offsets = [0, 256], sizes = [1, 128], strides = [1, 1]} : vector<1x384xf32> to vector<1x128xf32>
    %210 = vector.extract_strided_slice %200 {offsets = [0, 384], sizes = [1, 128], strides = [1, 1]} : vector<1x512xf32> to vector<1x128xf32>
    %211 = math.tanh %210 : vector<1x128xf32>
    %212 = arith.mulf %208, %194 : vector<1x128xf32>
    %213 = arith.mulf %207, %211 : vector<1x128xf32>
    %214 = arith.addf %212, %213 : vector<1x128xf32>
    %215 = math.tanh %214 : vector<1x128xf32>
    %216 = arith.mulf %209, %215 : vector<1x128xf32>
    %cst_73 = arith.constant 0.000000e+00 : f32
    %217 = vector.broadcast %cst_73 : f32 to vector<1x128xf32>
    %218 = arith.select %196, %216, %217 : vector<1x128xf32>
    %c7_74 = arith.constant 7 : index
    %c0_75 = arith.constant 0 : index
    %219 = vector.load %arg5[%c7_74, %c0_75] : memref<8x128xf32, #tpu.memory_space<vmem>>, vector<1x128xf32>
    tpu.vector_store %arg5[%c7_74, %c0_75], %218 {strides = array<i32>} : memref<8x128xf32, #tpu.memory_space<vmem>>, vector<1x128xf32>,
    %220 = arith.select %196, %216, %193 : vector<1x128xf32>
    %221 = arith.select %196, %214, %194 : vector<1x128xf32>
    %c0_76 = arith.constant 0 : index
    %c0_77 = arith.constant 0 : index
    %222 = vector.load %arg7[%c0_76, %c0_77] : memref<1x128xf32, #tpu.memory_space<vmem>>, vector<1x128xf32>
    tpu.vector_store %arg7[%c0_76, %c0_77], %220 {strides = array<i32>} : memref<1x128xf32, #tpu.memory_space<vmem>>, vector<1x128xf32>,
    %c0_78 = arith.constant 0 : index
    %c0_79 = arith.constant 0 : index
    %223 = vector.load %arg8[%c0_78, %c0_79] : memref<1x128xf32, #tpu.memory_space<vmem>>, vector<1x128xf32>
    tpu.vector_store %arg8[%c0_78, %c0_79], %221 {strides = array<i32>} : memref<1x128xf32, #tpu.memory_space<vmem>>, vector<1x128xf32>,
    %c1_i32_80 = arith.constant 1 : i32
    %224 = arith.cmpi eq, %arg0, %c1_i32_80 : i32
    %225 = arith.extui %224 : i1 to i32
    %c0_i32_81 = arith.constant 0 : i32
    %226 = arith.cmpi ne, %225, %c0_i32_81 : i32
    scf.if %226 {
      %c0_82 = arith.constant 0 : index
      %c0_83 = arith.constant 0 : index
      %227 = vector.load %arg6[%c0_82, %c0_83] : memref<1x128xf32, #tpu.memory_space<vmem>>, vector<1x128xf32>
      tpu.vector_store %arg6[%c0_82, %c0_83], %221 {strides = array<i32>} : memref<1x128xf32, #tpu.memory_space<vmem>>, vector<1x128xf32>,
    } else {
    }
    return
  }
  func.func @transform_0(%arg0: i32) -> (i32, i32) {
    %c0_i32 = arith.constant 0 : i32
    %c0_i32_0 = arith.constant 0 : i32
    return %arg0, %c0_i32 : i32, i32
  }
  func.func @transform_1(%arg0: i32) -> (i32, i32) {
    %c0_i32 = arith.constant 0 : i32
    %c0_i32_0 = arith.constant 0 : i32
    %c0_i32_1 = arith.constant 0 : i32
    return %c0_i32, %c0_i32_0 : i32, i32
  }
  func.func @transform_2(%arg0: i32) -> (i32, i32) {
    %c0_i32 = arith.constant 0 : i32
    %c0_i32_0 = arith.constant 0 : i32
    %c0_i32_1 = arith.constant 0 : i32
    return %c0_i32, %c0_i32_0 : i32, i32
  }
  func.func @transform_3(%arg0: i32) -> (i32, i32) {
    %c0_i32 = arith.constant 0 : i32
    %c0_i32_0 = arith.constant 0 : i32
    %c0_i32_1 = arith.constant 0 : i32
    return %c0_i32, %c0_i32_0 : i32, i32
  }
  func.func @transform_4(%arg0: i32) -> (i32, i32) {
    %c0_i32 = arith.constant 0 : i32
    %c0_i32_0 = arith.constant 0 : i32
    return %arg0, %c0_i32 : i32, i32
  }
  func.func @transform_5(%arg0: i32) -> (i32, i32) {
    %c0_i32 = arith.constant 0 : i32
    %c0_i32_0 = arith.constant 0 : i32
    %c0_i32_1 = arith.constant 0 : i32
    return %c0_i32, %c0_i32_0 : i32, i32
  }
}

</mosaic_0001>

<llo_original>
// kernel: encoder_rnn_encode.1
$region0: #{encoder_rnn_encode.1}
  #allocation0 [shape = 'u32[]', space=smem, size = 0x4, offset = 0x4, fixed_abs, tag = 'smem constant byte address 0x4 - core index']
  #allocation1 [shape = 'u32[72,128]{1,0:T(1,128)}', space=vmem, size = 0x9000, scoped, tag = 'internal scratch']
  #allocation2 [shape = 'f32[1,128]{1,0:T(1,128)}', space=vmem, size = 0x200, scoped, tag = 'scratch operand']
  #allocation3 [shape = 'f32[1,128]{1,0:T(1,128)}', space=vmem, size = 0x200, scoped, tag = 'scratch operand']
  %s0 = inlined_call_operand.vmem [shape: f32[16,512], index: 0, kind: input, shape index: {}]
  %s1 = inlined_call_operand.vmem [shape: f32[1,128], index: 1, kind: input, shape index: {}]
  %s2 = inlined_call_operand.vmem [shape: f32[1,128], index: 2, kind: input, shape index: {}]
  %s3 = inlined_call_operand.vmem [shape: f32[128,512], index: 3, kind: input, shape index: {}]
  %s4 = inlined_call_operand.vmem [shape: f32[16,128], index: 4, kind: output, shape index: {0}]
  %s5 = inlined_call_operand.hbm [shape: f32[1,128], index: 5, kind: output, shape index: {1}]
  %6 = xla_tuple %s4, %s5
  %s7 = sld [smem:[#allocation0]]
  $region65: #{encoder_rnn_encode.1} parent=0
    _
  %s9 = ssub.s32 1, %s7
  %s10 = scalar_select 0, %s9, %s7
  $region1: #{encoder_rnn_encode.1} parent=0
    #allocation4 [shape = 'u8[512]{0}', space=vmem, size = 0x400, scoped, tag = 'output window, operand 1, single buffered']
    #allocation5 [shape = 's32[2]{0}', space=sflag, size = 0x8, scoped, tag = 'scoped memory for encoder_rnn_encode.1']
    %11 = vsyncpa [#allocation5], 0
    loop: start=0, step=1, limit=4
    $region2: #{encoder_rnn_encode.1} parent=1 // loop_pre_header
      _
    $region3: #{encoder_rnn_encode.1} parent=1 // loop_header
      %s13 = sphi 0, %s17
      %p14 = scmp.ge.s32.totalorder %s13, 4
      %s23 = sphi 0, %s25
      %s26 = sphi 0, %s23
      %s27 = sphi 0, %s26
      %s43 = sphi 0, %s27
      %s47 = sphi 0, %s47
      %s49 = sphi 0, %s47
      %s50 = sphi 0, %s49
      %s64 = sphi 0, %s50
      %s68 = sphi 0, %s68
      %s70 = sphi 0, %s68
      %s71 = sphi 0, %s70
      %s85 = sphi 0, %s71
      %s89 = sphi 0, %s89
      %s91 = sphi 0, %s89
      %s92 = sphi 0, %s91
      %s106 = sphi 0, %s92
      %s112 = sphi 0, %s114
      %s115 = sphi 0, %s112
      %s116 = sphi 0, %s115
      %s132 = sphi 0, %s116
      %s136 = sphi 0, %s136
      %s138 = sphi 0, %s136
      %s139 = sphi 0, %s138
      %s153 = sphi 0, %s139
    $region4: #{encoder_rnn_encode.1} parent=1 // loop_header_branch
      %16 = sbr.rel (%p14) target = $region8
    $region5: #{encoder_rnn_encode.1} parent=1 // loop_body
      %s18 = ssub.s32 %s13, 1
      %s19 = ssub.s32 %s13, 2
      %s20 = sadd.s32 %s13, 1
      %s21 = ssub.s32 %s13, %s20
      %p22 = scmp.eq.s32.totalorder %s21, 0
      %s24 = sadd.s32 %s23, 1
      %s25 = scalar_select %p22, %s23, %s24
      %p28 = pneg %p22
      %p29 = scmp.eq.s32.totalorder %s13, 1
      %p30 = por %p28, %p29
      %p31 = scmp.ne.s32.totalorder %s23, %s26
      %p32 = scmp.eq.s32.totalorder %s13, 0
      %p33 = por %p31, %p32
      %p34 = scmp.ne.s32.totalorder %s23, %s26
      %p35 = scmp.eq.s32.totalorder %s18, 1
      %p36 = por %p34, %p35
      %p37 = scmp.ne.s32.totalorder %s26, %s27
      %p38 = scmp.eq.s32.totalorder %s18, 0
      %p39 = por %p37, %p38
      %p40 = scmp.ne.s32.totalorder %s26, %s27
      %p41 = scmp.eq.s32.totalorder %s19, 1
      %p42 = por %p40, %p41
      %p44 = scmp.ne.s32.totalorder %s27, %s43
      %p45 = scmp.eq.s32.totalorder %s19, 0
      %p46 = por %p44, %p45
      %s48 = sadd.s32 %s47, 1
      %p51 = scmp.eq.s32.totalorder %s13, 1
      %p52 = scmp.ne.s32.totalorder %s47, %s49
      %p53 = scmp.eq.s32.totalorder %s13, 0
      %p54 = por %p52, %p53
      %p55 = scmp.ne.s32.totalorder %s47, %s49
      %p56 = scmp.eq.s32.totalorder %s18, 1
      %p57 = por %p55, %p56
      %p58 = scmp.ne.s32.totalorder %s49, %s50
      %p59 = scmp.eq.s32.totalorder %s18, 0
      %p60 = por %p58, %p59
      %p61 = scmp.ne.s32.totalorder %s49, %s50
      %p62 = scmp.eq.s32.totalorder %s19, 1
      %p63 = por %p61, %p62
      %p65 = scmp.ne.s32.totalorder %s50, %s64
      %p66 = scmp.eq.s32.totalorder %s19, 0
      %p67 = por %p65, %p66
      %s69 = sadd.s32 %s68, 1
      %p72 = scmp.eq.s32.totalorder %s13, 1
      %p73 = scmp.ne.s32.totalorder %s68, %s70
      %p74 = scmp.eq.s32.totalorder %s13, 0
      %p75 = por %p73, %p74
      %p76 = scmp.ne.s32.totalorder %s68, %s70
      %p77 = scmp.eq.s32.totalorder %s18, 1
      %p78 = por %p76, %p77
      %p79 = scmp.ne.s32.totalorder %s70, %s71
      %p80 = scmp.eq.s32.totalorder %s18, 0
      %p81 = por %p79, %p80
      %p82 = scmp.ne.s32.totalorder %s70, %s71
      %p83 = scmp.eq.s32.totalorder %s19, 1
      %p84 = por %p82, %p83
      %p86 = scmp.ne.s32.totalorder %s71, %s85
      %p87 = scmp.eq.s32.totalorder %s19, 0
      %p88 = por %p86, %p87
      %s90 = sadd.s32 %s89, 1
      %p93 = scmp.eq.s32.totalorder %s13, 1
      %p94 = scmp.ne.s32.totalorder %s89, %s91
      %p95 = scmp.eq.s32.totalorder %s13, 0
      %p96 = por %p94, %p95
      %p97 = scmp.ne.s32.totalorder %s89, %s91
      %p98 = scmp.eq.s32.totalorder %s18, 1
      %p99 = por %p97, %p98
      %p100 = scmp.ne.s32.totalorder %s91, %s92
      %p101 = scmp.eq.s32.totalorder %s18, 0
      %p102 = por %p100, %p101
      %p103 = scmp.ne.s32.totalorder %s91, %s92
      %p104 = scmp.eq.s32.totalorder %s19, 1
      %p105 = por %p103, %p104
      %p107 = scmp.ne.s32.totalorder %s92, %s106
      %p108 = scmp.eq.s32.totalorder %s19, 0
      %p109 = por %p107, %p108
      %s110 = ssub.s32 %s13, %s20
      %p111 = scmp.eq.s32.totalorder %s110, 0
      %s113 = sadd.s32 %s112, 1
      %s114 = scalar_select %p111, %s112, %s113
      %p117 = pneg %p111
      %p118 = scmp.eq.s32.totalorder %s13, 1
      %p119 = por %p117, %p118
      %p120 = scmp.ne.s32.totalorder %s112, %s115
      %p121 = scmp.eq.s32.totalorder %s13, 0
      %p122 = por %p120, %p121
      %p123 = scmp.ne.s32.totalorder %s112, %s115
      %p124 = scmp.eq.s32.totalorder %s18, 1
      %p125 = por %p123, %p124
      %p126 = scmp.ne.s32.totalorder %s115, %s116
      %p127 = scmp.eq.s32.totalorder %s18, 0
      %p128 = por %p126, %p127
      %p129 = scmp.ne.s32.totalorder %s115, %s116
      %p130 = scmp.eq.s32.totalorder %s19, 1
      %p131 = por %p129, %p130
      %p133 = scmp.ne.s32.totalorder %s116, %s132
      %p134 = scmp.eq.s32.totalorder %s19, 0
      %p135 = por %p133, %p134
      %s137 = sadd.s32 %s136, 1
      %p140 = scmp.eq.s32.totalorder %s13, 1
      %p141 = scmp.ne.s32.totalorder %s136, %s138
      %p142 = scmp.eq.s32.totalorder %s13, 0
      %p143 = por %p141, %p142
      %p144 = scmp.ne.s32.totalorder %s136, %s138
      %p145 = scmp.eq.s32.totalorder %s18, 1
      %p146 = por %p144, %p145
      %p147 = scmp.ne.s32.totalorder %s138, %s139
      %p148 = scmp.eq.s32.totalorder %s18, 0
      %p149 = por %p147, %p148
      %p150 = scmp.ne.s32.totalorder %s138, %s139
      %p151 = scmp.eq.s32.totalorder %s19, 1
      %p152 = por %p150, %p151
      %p154 = scmp.ne.s32.totalorder %s139, %s153
      %p155 = scmp.eq.s32.totalorder %s19, 0
      %p156 = por %p154, %p155
      %p157 = scmp.le.s32.totalorder 1, %s13
      %p158 = scmp.lt.s32.totalorder %s13, 3
      %p159 = pnand %p157, %p158
      %p160 = pneg %p159
      // Predicated region
      $region9: #{encoder_rnn_encode.1} parent=5 // pred_check
        _
      $region10: #{encoder_rnn_encode.1} parent=5 // pred_check_branch
        %162 = sbr.rel (%p159) target = $region12
      $region11: #{encoder_rnn_encode.1} parent=5 // pred_region
        %s163 = ssub.s32 %s13, 1
        // Predicated region
        $region13: #{encoder_rnn_encode.1} parent=11 // pred_check
          %p164 = pneg %p60
        $region14: #{encoder_rnn_encode.1} parent=11 // pred_check_branch
          %166 = sbr.rel (%p164) target = $region16
        $region15: #{encoder_rnn_encode.1} parent=11 // pred_region
          _
        $region16: #{encoder_rnn_encode.1} parent=11 // pred_fallthru
          _
        // Predicated region
        $region17: #{encoder_rnn_encode.1} parent=11 // pred_check
          %p167 = pneg %p81
        $region18: #{encoder_rnn_encode.1} parent=11 // pred_check_branch
          %169 = sbr.rel (%p167) target = $region20
        $region19: #{encoder_rnn_encode.1} parent=11 // pred_region
          _
        $region20: #{encoder_rnn_encode.1} parent=11 // pred_fallthru
          _
        // Predicated region
        $region21: #{encoder_rnn_encode.1} parent=11 // pred_check
          %p170 = pneg %p102
        $region22: #{encoder_rnn_encode.1} parent=11 // pred_check_branch
          %172 = sbr.rel (%p170) target = $region24
        $region23: #{encoder_rnn_encode.1} parent=11 // pred_region
          _
        $region24: #{encoder_rnn_encode.1} parent=11 // pred_fallthru
          _
      $region12: #{encoder_rnn_encode.1} parent=5 // pred_fallthru
        _
      %p173 = scmp.lt.s32.totalorder %s13, 2
      // Predicated region
      $region25: #{encoder_rnn_encode.1} parent=5 // pred_check
        %p174 = pneg %p173
      $region26: #{encoder_rnn_encode.1} parent=5 // pred_check_branch
        %176 = sbr.rel (%p174) target = $region28
      $region27: #{encoder_rnn_encode.1} parent=5 // pred_region
        // Predicated region
        $region29: #{encoder_rnn_encode.1} parent=27 // pred_check
          %p177 = pneg %p33
        $region30: #{encoder_rnn_encode.1} parent=27 // pred_check_branch
          %179 = sbr.rel (%p177) target = $region32
        $region31: #{encoder_rnn_encode.1} parent=27 // pred_region
          %p180 = scmp.lt.s32.totalorder %s13, 1
          %s181 = scalar_select %p180, %s13, 1
          %s182 = smul.addr %s181, 4
          %s183 = smul.addr %s182, 8
          %s184 = scalar_lea.vmem %s0, %s183
        $region32: #{encoder_rnn_encode.1} parent=27 // pred_fallthru
          _
      $region28: #{encoder_rnn_encode.1} parent=5 // pred_fallthru
        _
      %p185 = scmp.le.s32.totalorder 1, %s13
      %p186 = scmp.lt.s32.totalorder %s13, 3
      %p187 = pnand %p185, %p186
      %p188 = pneg %p187
      // Predicated region
      $region33: #{encoder_rnn_encode.1} parent=5 // pred_check
        _
      $region34: #{encoder_rnn_encode.1} parent=5 // pred_check_branch
        %190 = sbr.rel (%p187) target = $region36
      $region35: #{encoder_rnn_encode.1} parent=5 // pred_region
        %s191 = ssub.s32 %s13, 1
        %p192 = scmp.lt.s32.totalorder %s18, 1
        %s193 = scalar_select %p192, %s18, 1
        %s194 = smul.addr %s193, 4
        %s195 = smul.addr %s194, 8
        %s196 = scalar_lea.vmem %s0, %s195
        %p197 = pneg %p39
        %p198 = pneg %p36
        %p199 = pneg %p60
        %p200 = pneg %p57
        %p201 = pneg %p81
        %p202 = pneg %p78
        %p203 = pneg %p102
        %p204 = pneg %p99
        %p205 = pneg %p128
        %p206 = pneg %p125
        %p207 = scmp.lt.s32.totalorder %s18, 1
        %s208 = scalar_select %p207, %s18, 1
        %s209 = smul.addr %s208, 8
        %s210 = scalar_lea.vmem %s4, %s209
        %p211 = pneg %p149
        %p212 = pneg %p146
        %p213 = scmp.lt.s32.totalorder %s18, 1
        %s214 = scalar_select %p213, %s18, 1
        %s215 = smul.addr %s214, 4
        %s216 = smul.addr %s215, 8
        %s217 = scalar_lea.vmem %s0, %s216
        %p218 = scmp.lt.s32.totalorder %s18, 1
        %s219 = scalar_select %p218, %s18, 1
        %s220 = smul.addr %s219, 8
        %s221 = scalar_lea.vmem %s4, %s220
        %s222 = smul.u32 %s18, 8
        %p223 = scmp.eq.s32.totalorder %s18, 0
        // Predicated region
        $region37: #{encoder_rnn_encode.1} parent=35 // pred_check
          %p224 = pneg %p223
        $region38: #{encoder_rnn_encode.1} parent=35 // pred_check_branch
          %226 = sbr.rel (%p224) target = $region40
        $region39: #{encoder_rnn_encode.1} parent=35 // pred_region
          %v227 = vld [vmem:[%s1] sm:$0x1]
          %228 = vst [vmem:[#allocation2] sm:$0x1] %v227
          %v229 = vld [vmem:[%s2] sm:$0x1]
          %230 = vst [vmem:[#allocation3] sm:$0x1] %v229
        $region40: #{encoder_rnn_encode.1} parent=35 // pred_fallthru
          _
        %v231 = vld [vmem:[#allocation2] sm:$0x1]
        %v232 = vld [vmem:[#allocation3] sm:$0x1]
        %p233 = scmp.lt.s32.totalorder %s222, 11
        %v234 = vld [vmem:[%s217] ss:$8 sm:$0xf]
        %v235 = vld [vmem:[%s3] sm:$0xff]
        %v236 = vld [vmem:[%s3 + $0x8] sm:$0xff]
        %v237 = vld [vmem:[%s3 + $0x10] sm:$0xff]
        %v238 = vld [vmem:[%s3 + $0x18] sm:$0xff]
        %v239 = vld [vmem:[%s3 + $0x20] sm:$0xff]
        %v240 = vld [vmem:[%s3 + $0x28] sm:$0xff]
        %v241 = vld [vmem:[%s3 + $0x30] sm:$0xff]
        %v242 = vld [vmem:[%s3 + $0x38] sm:$0xff]
        %v243 = vld [vmem:[%s3 + $0x40] sm:$0xff]
        %v244 = vld [vmem:[%s3 + $0x48] sm:$0xff]
        %v245 = vld [vmem:[%s3 + $0x50] sm:$0xff]
        %v246 = vld [vmem:[%s3 + $0x58] sm:$0xff]
        %v247 = vld [vmem:[%s3 + $0x60] sm:$0xff]
        %v248 = vld [vmem:[%s3 + $0x68] sm:$0xff]
        %v249 = vld [vmem:[%s3 + $0x70] sm:$0xff]
        %v250 = vld [vmem:[%s3 + $0x78] sm:$0xff]
        %v251 = vld [vmem:[%s3 + $0x80] sm:$0xff]
        %v252 = vld [vmem:[%s3 + $0x88] sm:$0xff]
        %v253 = vld [vmem:[%s3 + $0x90] sm:$0xff]
        %v254 = vld [vmem:[%s3 + $0x98] sm:$0xff]
        %v255 = vld [vmem:[%s3 + $0xa0] sm:$0xff]
        %v256 = vld [vmem:[%s3 + $0xa8] sm:$0xff]
        %v257 = vld [vmem:[%s3 + $0xb0] sm:$0xff]
        %v258 = vld [vmem:[%s3 + $0xb8] sm:$0xff]
        %v259 = vld [vmem:[%s3 + $0xc0] sm:$0xff]
        %v260 = vld [vmem:[%s3 + $0xc8] sm:$0xff]
        %v261 = vld [vmem:[%s3 + $0xd0] sm:$0xff]
        %v262 = vld [vmem:[%s3 + $0xd8] sm:$0xff]
        %v263 = vld [vmem:[%s3 + $0xe0] sm:$0xff]
        %v264 = vld [vmem:[%s3 + $0xe8] sm:$0xff]
        %v265 = vld [vmem:[%s3 + $0xf0] sm:$0xff]
        %v266 = vld [vmem:[%s3 + $0xf8] sm:$0xff]
        %v267 = vld [vmem:[%s3 + $0x100] sm:$0xff]
        %v268 = vld [vmem:[%s3 + $0x108] sm:$0xff]
        %v269 = vld [vmem:[%s3 + $0x110] sm:$0xff]
        %v270 = vld [vmem:[%s3 + $0x118] sm:$0xff]
        %v271 = vld [vmem:[%s3 + $0x120] sm:$0xff]
        %v272 = vld [vmem:[%s3 + $0x128] sm:$0xff]
        %v273 = vld [vmem:[%s3 + $0x130] sm:$0xff]
        %v274 = vld [vmem:[%s3 + $0x138] sm:$0xff]
        %v275 = vld [vmem:[%s3 + $0x140] sm:$0xff]
        %v276 = vld [vmem:[%s3 + $0x148] sm:$0xff]
        %v277 = vld [vmem:[%s3 + $0x150] sm:$0xff]
        %v278 = vld [vmem:[%s3 + $0x158] sm:$0xff]
        %v279 = vld [vmem:[%s3 + $0x160] sm:$0xff]
        %v280 = vld [vmem:[%s3 + $0x168] sm:$0xff]
        %v281 = vld [vmem:[%s3 + $0x170] sm:$0xff]
        %v282 = vld [vmem:[%s3 + $0x178] sm:$0xff]
        %v283 = vld [vmem:[%s3 + $0x180] sm:$0xff]
        %v284 = vld [vmem:[%s3 + $0x188] sm:$0xff]
        %v285 = vld [vmem:[%s3 + $0x190] sm:$0xff]
        %v286 = vld [vmem:[%s3 + $0x198] sm:$0xff]
        %v287 = vld [vmem:[%s3 + $0x1a0] sm:$0xff]
        %v288 = vld [vmem:[%s3 + $0x1a8] sm:$0xff]
        %v289 = vld [vmem:[%s3 + $0x1b0] sm:$0xff]
        %v290 = vld [vmem:[%s3 + $0x1b8] sm:$0xff]
        %v291 = vld [vmem:[%s3 + $0x1c0] sm:$0xff]
        %v292 = vld [vmem:[%s3 + $0x1c8] sm:$0xff]
        %v293 = vld [vmem:[%s3 + $0x1d0] sm:$0xff]
        %v294 = vld [vmem:[%s3 + $0x1d8] sm:$0xff]
        %v295 = vld [vmem:[%s3 + $0x1e0] sm:$0xff]
        %v296 = vld [vmem:[%s3 + $0x1e8] sm:$0xff]
        %v297 = vld [vmem:[%s3 + $0x1f0] sm:$0xff]
        %v298 = vld [vmem:[%s3 + $0x1f8] sm:$0xff]
        %299 = vmatpush.msra.mxu0 %v295
        %300 = vmatpush.msra.mxu0 %v291
        %301 = vmatpush.msra.mxu0 %v287
        %302 = vmatpush.msra.mxu0 %v283
        %303 = vmatpush.msra.mxu0 %v279
        %304 = vmatpush.msra.mxu0 %v275
        %305 = vmatpush.msra.mxu0 %v271
        %306 = vmatpush.msra.mxu0 %v267
        %307 = vmatpush.msra.mxu0 %v263
        %308 = vmatpush.msra.mxu0 %v259
        %309 = vmatpush.msra.mxu0 %v255
        %310 = vmatpush.msra.mxu0 %v251
        %311 = vmatpush.msra.mxu0 %v247
        %312 = vmatpush.msra.mxu0 %v243
        %313 = vmatpush.msra.mxu0 %v239
        %314 = vmatpush.msra.mxu0 %v235
        %315 = vmatmul.f32.gmra.mxu0 %v231
        %v316 = vpop.f32.mrf.mxu0
        %v317 = vadd.f32 0.0, %v316
        %318 = vdwg.mxu0
        %319 = vmatpush.msra.mxu0 %v296
        %320 = vmatpush.msra.mxu0 %v292
        %321 = vmatpush.msra.mxu0 %v288
        %322 = vmatpush.msra.mxu0 %v284
        %323 = vmatpush.msra.mxu0 %v280
        %324 = vmatpush.msra.mxu0 %v276
        %325 = vmatpush.msra.mxu0 %v272
        %326 = vmatpush.msra.mxu0 %v268
        %327 = vmatpush.msra.mxu0 %v264
        %328 = vmatpush.msra.mxu0 %v260
        %329 = vmatpush.msra.mxu0 %v256
        %330 = vmatpush.msra.mxu0 %v252
        %331 = vmatpush.msra.mxu0 %v248
        %332 = vmatpush.msra.mxu0 %v244
        %333 = vmatpush.msra.mxu0 %v240
        %334 = vmatpush.msra.mxu0 %v236
        %335 = vmatmul.f32.gmra.mxu0 %v231
        %v336 = vpop.f32.mrf.mxu0
        %v337 = vadd.f32 0.0, %v336
        %338 = vdwg.mxu0
        %339 = vmatpush.msra.mxu0 %v297
        %340 = vmatpush.msra.mxu0 %v293
        %341 = vmatpush.msra.mxu0 %v289
        %342 = vmatpush.msra.mxu0 %v285
        %343 = vmatpush.msra.mxu0 %v281
        %344 = vmatpush.msra.mxu0 %v277
        %345 = vmatpush.msra.mxu0 %v273
        %346 = vmatpush.msra.mxu0 %v269
        %347 = vmatpush.msra.mxu0 %v265
        %348 = vmatpush.msra.mxu0 %v261
        %349 = vmatpush.msra.mxu0 %v257
        %350 = vmatpush.msra.mxu0 %v253
        %351 = vmatpush.msra.mxu0 %v249
        %352 = vmatpush.msra.mxu0 %v245
        %353 = vmatpush.msra.mxu0 %v241
        %354 = vmatpush.msra.mxu0 %v237
        %355 = vmatmul.f32.gmra.mxu0 %v231
        %v356 = vpop.f32.mrf.mxu0
        %v357 = vadd.f32 0.0, %v356
        %358 = vdwg.mxu0
        %359 = vmatpush.msra.mxu0 %v298
        %360 = vmatpush.msra.mxu0 %v294
        %361 = vmatpush.msra.mxu0 %v290
        %362 = vmatpush.msra.mxu0 %v286
        %363 = vmatpush.msra.mxu0 %v282
        %364 = vmatpush.msra.mxu0 %v278
        %365 = vmatpush.msra.mxu0 %v274
        %366 = vmatpush.msra.mxu0 %v270
        %367 = vmatpush.msra.mxu0 %v266
        %368 = vmatpush.msra.mxu0 %v262
        %369 = vmatpush.msra.mxu0 %v258
        %370 = vmatpush.msra.mxu0 %v254
        %371 = vmatpush.msra.mxu0 %v250
        %372 = vmatpush.msra.mxu0 %v246
        %373 = vmatpush.msra.mxu0 %v242
        %374 = vmatpush.msra.mxu0 %v238
        %375 = vmatmul.f32.gmra.mxu0 %v231
        %v376 = vpop.f32.mrf.mxu0
        %v377 = vadd.f32 0.0, %v376
        %378 = vdwg.mxu0
        %v383 = vrot.slane %v337, 7
        %v384 = vrot.slane %v357, 6
        %v385 = vrot.slane %v377, 5
        %vm386 = vcmask 1040384
        %v387 = vsel %vm386, %v317, %v383
        %vm388 = vcmask 1042434
        %v389 = vsel %vm388, %v384, %v385
        %vm390 = vcmask 1041408
        %v391 = vsel %vm390, %v387, %v389
        %v393 = vadd.f32 %v234, %v391
        %v394 = vxor.u32 %v393, 2147483648
        %v395 = vmul.f32 %v394, 1.442695
        %v396 = vpow.pop %v395
        %v397 = vadd.f32 %v396, 1.0
        %v398 = vrcp.pop %v397
        %v399 = vmul.f32 %v397, %v398
        %v400 = vsub.f32 1.0, %v399
        %v401 = vmul.f32 %v398, %v400
        %v402 = vadd.f32 %v398, %v401
        %vm403 = vweird.f32 %v397
        %vm404 = vweird.f32 %v398
        %vm405 = vmor %vm403, %vm404
        %v406 = vsel %vm405, %v398, %v402
        %v407 = vand.u32 2147483647, %v397
        %vm408 = vcmp.eq.f32.partialorder %v407, 8.507059e+37
        %v409 = vand.u32 %v397, 2147483648
        %v410 = vor.u32 1.1754944e-38, %v409
        %v411 = vsel %vm408, %v410, %v406
        %v412 = vmul.f32 1.0, %v411
        %v414 = vrot.slane %v393, 3
        %v416 = vtanh.pop %v414
        %v418 = vrot.slane %v412, 1
        %v420 = vmul.f32 %v418, %v232
        %v421 = vmul.f32 %v412, %v416
        %v422 = vadd.f32 %v420, %v421
        %v423 = vtanh.pop %v422
        %v424 = vrot.slane %v412, 2
        %v426 = vmul.f32 %v424, %v423
        %s427 = scalar_select %p233, 1, 0
        %v428 = vstv %s427
        %vm429 = vcmp.eq.s32.totalorder %v428, 1
        %v430 = vsel %vm429, %v426, 0.0
        %431 = vst [vmem:[%s221] sm:$0x1] %v430
        %v432 = vsel %vm429, %v426, %v231
        %v433 = vsel %vm429, %v422, %v232
        %s434 = sadd.s32 %s222, 1
        %p435 = scmp.lt.s32.totalorder %s434, 11
        %s436 = scalar_lea.vmem %s217, 1
        %v437 = vld [vmem:[%s436] ss:$8 sm:$0xf]
        %v438 = vld [vmem:[%s3] sm:$0xff]
        %v439 = vld [vmem:[%s3 + $0x8] sm:$0xff]
        %v440 = vld [vmem:[%s3 + $0x10] sm:$0xff]
        %v441 = vld [vmem:[%s3 + $0x18] sm:$0xff]
        %v442 = vld [vmem:[%s3 + $0x20] sm:$0xff]
        %v443 = vld [vmem:[%s3 + $0x28] sm:$0xff]
        %v444 = vld [vmem:[%s3 + $0x30] sm:$0xff]
        %v445 = vld [vmem:[%s3 + $0x38] sm:$0xff]
        %v446 = vld [vmem:[%s3 + $0x40] sm:$0xff]
        %v447 = vld [vmem:[%s3 + $0x48] sm:$0xff]
        %v448 = vld [vmem:[%s3 + $0x50] sm:$0xff]
        %v449 = vld [vmem:[%s3 + $0x58] sm:$0xff]
        %v450 = vld [vmem:[%s3 + $0x60] sm:$0xff]
        %v451 = vld [vmem:[%s3 + $0x68] sm:$0xff]
        %v452 = vld [vmem:[%s3 + $0x70] sm:$0xff]
        %v453 = vld [vmem:[%s3 + $0x78] sm:$0xff]
        %v454 = vld [vmem:[%s3 + $0x80] sm:$0xff]
        %v455 = vld [vmem:[%s3 + $0x88] sm:$0xff]
        %v456 = vld [vmem:[%s3 + $0x90] sm:$0xff]
        %v457 = vld [vmem:[%s3 + $0x98] sm:$0xff]
        %v458 = vld [vmem:[%s3 + $0xa0] sm:$0xff]
        %v459 = vld [vmem:[%s3 + $0xa8] sm:$0xff]
        %v460 = vld [vmem:[%s3 + $0xb0] sm:$0xff]
        %v461 = vld [vmem:[%s3 + $0xb8] sm:$0xff]
        %v462 = vld [vmem:[%s3 + $0xc0] sm:$0xff]
        %v463 = vld [vmem:[%s3 + $0xc8] sm:$0xff]
        %v464 = vld [vmem:[%s3 + $0xd0] sm:$0xff]
        %v465 = vld [vmem:[%s3 + $0xd8] sm:$0xff]
        %v466 = vld [vmem:[%s3 + $0xe0] sm:$0xff]
        %v467 = vld [vmem:[%s3 + $0xe8] sm:$0xff]
        %v468 = vld [vmem:[%s3 + $0xf0] sm:$0xff]
        %v469 = vld [vmem:[%s3 + $0xf8] sm:$0xff]
        %v470 = vld [vmem:[%s3 + $0x100] sm:$0xff]
        %v471 = vld [vmem:[%s3 + $0x108] sm:$0xff]
        %v472 = vld [vmem:[%s3 + $0x110] sm:$0xff]
        %v473 = vld [vmem:[%s3 + $0x118] sm:$0xff]
        %v474 = vld [vmem:[%s3 + $0x120] sm:$0xff]
        %v475 = vld [vmem:[%s3 + $0x128] sm:$0xff]
        %v476 = vld [vmem:[%s3 + $0x130] sm:$0xff]
        %v477 = vld [vmem:[%s3 + $0x138] sm:$0xff]
        %v478 = vld [vmem:[%s3 + $0x140] sm:$0xff]
        %v479 = vld [vmem:[%s3 + $0x148] sm:$0xff]
        %v480 = vld [vmem:[%s3 + $0x150] sm:$0xff]
        %v481 = vld [vmem:[%s3 + $0x158] sm:$0xff]
        %v482 = vld [vmem:[%s3 + $0x160] sm:$0xff]
        %v483 = vld [vmem:[%s3 + $0x168] sm:$0xff]
        %v484 = vld [vmem:[%s3 + $0x170] sm:$0xff]
        %v485 = vld [vmem:[%s3 + $0x178] sm:$0xff]
        %v486 = vld [vmem:[%s3 + $0x180] sm:$0xff]
        %v487 = vld [vmem:[%s3 + $0x188] sm:$0xff]
        %v488 = vld [vmem:[%s3 + $0x190] sm:$0xff]
        %v489 = vld [vmem:[%s3 + $0x198] sm:$0xff]
        %v490 = vld [vmem:[%s3 + $0x1a0] sm:$0xff]
        %v491 = vld [vmem:[%s3 + $0x1a8] sm:$0xff]
        %v492 = vld [vmem:[%s3 + $0x1b0] sm:$0xff]
        %v493 = vld [vmem:[%s3 + $0x1b8] sm:$0xff]
        %v494 = vld [vmem:[%s3 + $0x1c0] sm:$0xff]
        %v495 = vld [vmem:[%s3 + $0x1c8] sm:$0xff]
        %v496 = vld [vmem:[%s3 + $0x1d0] sm:$0xff]
        %v497 = vld [vmem:[%s3 + $0x1d8] sm:$0xff]
        %v498 = vld [vmem:[%s3 + $0x1e0] sm:$0xff]
        %v499 = vld [vmem:[%s3 + $0x1e8] sm:$0xff]
        %v500 = vld [vmem:[%s3 + $0x1f0] sm:$0xff]
        %v501 = vld [vmem:[%s3 + $0x1f8] sm:$0xff]
        %502 = vmatpush.msra.mxu0 %v498
        %503 = vmatpush.msra.mxu0 %v494
        %504 = vmatpush.msra.mxu0 %v490
        %505 = vmatpush.msra.mxu0 %v486
        %506 = vmatpush.msra.mxu0 %v482
        %507 = vmatpush.msra.mxu0 %v478
        %508 = vmatpush.msra.mxu0 %v474
        %509 = vmatpush.msra.mxu0 %v470
        %510 = vmatpush.msra.mxu0 %v466
        %511 = vmatpush.msra.mxu0 %v462
        %512 = vmatpush.msra.mxu0 %v458
        %513 = vmatpush.msra.mxu0 %v454
        %514 = vmatpush.msra.mxu0 %v450
        %515 = vmatpush.msra.mxu0 %v446
        %516 = vmatpush.msra.mxu0 %v442
        %517 = vmatpush.msra.mxu0 %v438
        %518 = vmatmul.f32.gmra.mxu0 %v432
        %v519 = vpop.f32.mrf.mxu0
        %v520 = vadd.f32 0.0, %v519
        %521 = vdwg.mxu0
        %522 = vmatpush.msra.mxu0 %v499
        %523 = vmatpush.msra.mxu0 %v495
        %524 = vmatpush.msra.mxu0 %v491
        %525 = vmatpush.msra.mxu0 %v487
        %526 = vmatpush.msra.mxu0 %v483
        %527 = vmatpush.msra.mxu0 %v479
        %528 = vmatpush.msra.mxu0 %v475
        %529 = vmatpush.msra.mxu0 %v471
        %530 = vmatpush.msra.mxu0 %v467
        %531 = vmatpush.msra.mxu0 %v463
        %532 = vmatpush.msra.mxu0 %v459
        %533 = vmatpush.msra.mxu0 %v455
        %534 = vmatpush.msra.mxu0 %v451
        %535 = vmatpush.msra.mxu0 %v447
        %536 = vmatpush.msra.mxu0 %v443
        %537 = vmatpush.msra.mxu0 %v439
        %538 = vmatmul.f32.gmra.mxu0 %v432
        %v539 = vpop.f32.mrf.mxu0
        %v540 = vadd.f32 0.0, %v539
        %541 = vdwg.mxu0
        %542 = vmatpush.msra.mxu0 %v500
        %543 = vmatpush.msra.mxu0 %v496
        %544 = vmatpush.msra.mxu0 %v492
        %545 = vmatpush.msra.mxu0 %v488
        %546 = vmatpush.msra.mxu0 %v484
        %547 = vmatpush.msra.mxu0 %v480
        %548 = vmatpush.msra.mxu0 %v476
        %549 = vmatpush.msra.mxu0 %v472
        %550 = vmatpush.msra.mxu0 %v468
        %551 = vmatpush.msra.mxu0 %v464
        %552 = vmatpush.msra.mxu0 %v460
        %553 = vmatpush.msra.mxu0 %v456
        %554 = vmatpush.msra.mxu0 %v452
        %555 = vmatpush.msra.mxu0 %v448
        %556 = vmatpush.msra.mxu0 %v444
        %557 = vmatpush.msra.mxu0 %v440
        %558 = vmatmul.f32.gmra.mxu0 %v432
        %v559 = vpop.f32.mrf.mxu0
        %v560 = vadd.f32 0.0, %v559
        %561 = vdwg.mxu0
        %562 = vmatpush.msra.mxu0 %v501
        %563 = vmatpush.msra.mxu0 %v497
        %564 = vmatpush.msra.mxu0 %v493
        %565 = vmatpush.msra.mxu0 %v489
        %566 = vmatpush.msra.mxu0 %v485
        %567 = vmatpush.msra.mxu0 %v481
        %568 = vmatpush.msra.mxu0 %v477
        %569 = vmatpush.msra.mxu0 %v473
        %570 = vmatpush.msra.mxu0 %v469
        %571 = vmatpush.msra.mxu0 %v465
        %572 = vmatpush.msra.mxu0 %v461
        %573 = vmatpush.msra.mxu0 %v457
        %574 = vmatpush.msra.mxu0 %v453
        %575 = vmatpush.msra.mxu0 %v449
        %576 = vmatpush.msra.mxu0 %v445
        %577 = vmatpush.msra.mxu0 %v441
        %578 = vmatmul.f32.gmra.mxu0 %v432
        %v579 = vpop.f32.mrf.mxu0
        %v580 = vadd.f32 0.0, %v579
        %581 = vdwg.mxu0
        %v586 = vrot.slane %v540, 7
        %v587 = vrot.slane %v560, 6
        %v588 = vrot.slane %v580, 5
        %v589 = vsel %vm386, %v520, %v586
        %v590 = vsel %vm388, %v587, %v588
        %v591 = vsel %vm390, %v589, %v590
        %v593 = vadd.f32 %v437, %v591
        %v594 = vxor.u32 %v593, 2147483648
        %v595 = vmul.f32 %v594, 1.442695
        %v596 = vpow.pop %v595
        %v597 = vadd.f32 %v596, 1.0
        %v598 = vrcp.pop %v597
        %v599 = vmul.f32 %v597, %v598
        %v600 = vsub.f32 1.0, %v599
        %v601 = vmul.f32 %v598, %v600
        %v602 = vadd.f32 %v598, %v601
        %vm603 = vweird.f32 %v597
        %vm604 = vweird.f32 %v598
        %vm605 = vmor %vm603, %vm604
        %v606 = vsel %vm605, %v598, %v602
        %v607 = vand.u32 2147483647, %v597
        %vm608 = vcmp.eq.f32.partialorder %v607, 8.507059e+37
        %v609 = vand.u32 %v597, 2147483648
        %v610 = vor.u32 1.1754944e-38, %v609
        %v611 = vsel %vm608, %v610, %v606
        %v612 = vmul.f32 1.0, %v611
        %v614 = vrot.slane %v593, 3
        %v616 = vtanh.pop %v614
        %v618 = vrot.slane %v612, 1
        %v620 = vmul.f32 %v618, %v433
        %v621 = vmul.f32 %v612, %v616
        %v622 = vadd.f32 %v620, %v621
        %v623 = vtanh.pop %v622
        %v624 = vrot.slane %v612, 2
        %v626 = vmul.f32 %v624, %v623
        %s627 = scalar_select %p435, 1, 0
        %v628 = vstv %s627
        %vm629 = vcmp.eq.s32.totalorder %v628, 1
        %v630 = vsel %vm629, %v626, 0.0
        %631 = vst [vmem:[%s221 + $0x1] sm:$0x1] %v630
        %v632 = vsel %vm629, %v626, %v432
        %v633 = vsel %vm629, %v622, %v433
        %s634 = sadd.s32 %s222, 2
        %p635 = scmp.lt.s32.totalorder %s634, 11
        %s636 = scalar_lea.vmem %s217, 2
        %v637 = vld [vmem:[%s636] ss:$8 sm:$0xf]
        %v638 = vld [vmem:[%s3] sm:$0xff]
        %v639 = vld [vmem:[%s3 + $0x8] sm:$0xff]
        %v640 = vld [vmem:[%s3 + $0x10] sm:$0xff]
        %v641 = vld [vmem:[%s3 + $0x18] sm:$0xff]
        %v642 = vld [vmem:[%s3 + $0x20] sm:$0xff]
        %v643 = vld [vmem:[%s3 + $0x28] sm:$0xff]
        %v644 = vld [vmem:[%s3 + $0x30] sm:$0xff]
        %v645 = vld [vmem:[%s3 + $0x38] sm:$0xff]
        %v646 = vld [vmem:[%s3 + $0x40] sm:$0xff]
        %v647 = vld [vmem:[%s3 + $0x48] sm:$0xff]
        %v648 = vld [vmem:[%s3 + $0x50] sm:$0xff]
        %v649 = vld [vmem:[%s3 + $0x58] sm:$0xff]
        %v650 = vld [vmem:[%s3 + $0x60] sm:$0xff]
        %v651 = vld [vmem:[%s3 + $0x68] sm:$0xff]
        %v652 = vld [vmem:[%s3 + $0x70] sm:$0xff]
        %v653 = vld [vmem:[%s3 + $0x78] sm:$0xff]
        %v654 = vld [vmem:[%s3 + $0x80] sm:$0xff]
        %v655 = vld [vmem:[%s3 + $0x88] sm:$0xff]
        %v656 = vld [vmem:[%s3 + $0x90] sm:$0xff]
        %v657 = vld [vmem:[%s3 + $0x98] sm:$0xff]
        %v658 = vld [vmem:[%s3 + $0xa0] sm:$0xff]
        %v659 = vld [vmem:[%s3 + $0xa8] sm:$0xff]
        %v660 = vld [vmem:[%s3 + $0xb0] sm:$0xff]
        %v661 = vld [vmem:[%s3 + $0xb8] sm:$0xff]
        %v662 = vld [vmem:[%s3 + $0xc0] sm:$0xff]
        %v663 = vld [vmem:[%s3 + $0xc8] sm:$0xff]
        %v664 = vld [vmem:[%s3 + $0xd0] sm:$0xff]
        %v665 = vld [vmem:[%s3 + $0xd8] sm:$0xff]
        %v666 = vld [vmem:[%s3 + $0xe0] sm:$0xff]
        %v667 = vld [vmem:[%s3 + $0xe8] sm:$0xff]
        %v668 = vld [vmem:[%s3 + $0xf0] sm:$0xff]
        %v669 = vld [vmem:[%s3 + $0xf8] sm:$0xff]
        %v670 = vld [vmem:[%s3 + $0x100] sm:$0xff]
        %v671 = vld [vmem:[%s3 + $0x108] sm:$0xff]
        %v672 = vld [vmem:[%s3 + $0x110] sm:$0xff]
        %v673 = vld [vmem:[%s3 + $0x118] sm:$0xff]
        %v674 = vld [vmem:[%s3 + $0x120] sm:$0xff]
        %v675 = vld [vmem:[%s3 + $0x128] sm:$0xff]
        %v676 = vld [vmem:[%s3 + $0x130] sm:$0xff]
        %v677 = vld [vmem:[%s3 + $0x138] sm:$0xff]
        %v678 = vld [vmem:[%s3 + $0x140] sm:$0xff]
        %v679 = vld [vmem:[%s3 + $0x148] sm:$0xff]
        %v680 = vld [vmem:[%s3 + $0x150] sm:$0xff]
        %v681 = vld [vmem:[%s3 + $0x158] sm:$0xff]
        %v682 = vld [vmem:[%s3 + $0x160] sm:$0xff]
        %v683 = vld [vmem:[%s3 + $0x168] sm:$0xff]
        %v684 = vld [vmem:[%s3 + $0x170] sm:$0xff]
        %v685 = vld [vmem:[%s3 + $0x178] sm:$0xff]
        %v686 = vld [vmem:[%s3 + $0x180] sm:$0xff]
        %v687 = vld [vmem:[%s3 + $0x188] sm:$0xff]
        %v688 = vld [vmem:[%s3 + $0x190] sm:$0xff]
        %v689 = vld [vmem:[%s3 + $0x198] sm:$0xff]
        %v690 = vld [vmem:[%s3 + $0x1a0] sm:$0xff]
        %v691 = vld [vmem:[%s3 + $0x1a8] sm:$0xff]
        %v692 = vld [vmem:[%s3 + $0x1b0] sm:$0xff]
        %v693 = vld [vmem:[%s3 + $0x1b8] sm:$0xff]
        %v694 = vld [vmem:[%s3 + $0x1c0] sm:$0xff]
        %v695 = vld [vmem:[%s3 + $0x1c8] sm:$0xff]
        %v696 = vld [vmem:[%s3 + $0x1d0] sm:$0xff]
        %v697 = vld [vmem:[%s3 + $0x1d8] sm:$0xff]
        %v698 = vld [vmem:[%s3 + $0x1e0] sm:$0xff]
        %v699 = vld [vmem:[%s3 + $0x1e8] sm:$0xff]
        %v700 = vld [vmem:[%s3 + $0x1f0] sm:$0xff]
        %v701 = vld [vmem:[%s3 + $0x1f8] sm:$0xff]
        %702 = vmatpush.msra.mxu0 %v698
        %703 = vmatpush.msra.mxu0 %v694
        %704 = vmatpush.msra.mxu0 %v690
        %705 = vmatpush.msra.mxu0 %v686
        %706 = vmatpush.msra.mxu0 %v682
        %707 = vmatpush.msra.mxu0 %v678
        %708 = vmatpush.msra.mxu0 %v674
        %709 = vmatpush.msra.mxu0 %v670
        %710 = vmatpush.msra.mxu0 %v666
        %711 = vmatpush.msra.mxu0 %v662
        %712 = vmatpush.msra.mxu0 %v658
        %713 = vmatpush.msra.mxu0 %v654
        %714 = vmatpush.msra.mxu0 %v650
        %715 = vmatpush.msra.mxu0 %v646
        %716 = vmatpush.msra.mxu0 %v642
        %717 = vmatpush.msra.mxu0 %v638
        %718 = vmatmul.f32.gmra.mxu0 %v632
        %v719 = vpop.f32.mrf.mxu0
        %v720 = vadd.f32 0.0, %v719
        %721 = vdwg.mxu0
        %722 = vmatpush.msra.mxu0 %v699
        %723 = vmatpush.msra.mxu0 %v695
        %724 = vmatpush.msra.mxu0 %v691
        %725 = vmatpush.msra.mxu0 %v687
        %726 = vmatpush.msra.mxu0 %v683
        %727 = vmatpush.msra.mxu0 %v679
        %728 = vmatpush.msra.mxu0 %v675
        %729 = vmatpush.msra.mxu0 %v671
        %730 = vmatpush.msra.mxu0 %v667
        %731 = vmatpush.msra.mxu0 %v663
        %732 = vmatpush.msra.mxu0 %v659
        %733 = vmatpush.msra.mxu0 %v655
        %734 = vmatpush.msra.mxu0 %v651
        %735 = vmatpush.msra.mxu0 %v647
        %736 = vmatpush.msra.mxu0 %v643
        %737 = vmatpush.msra.mxu0 %v639
        %738 = vmatmul.f32.gmra.mxu0 %v632
        %v739 = vpop.f32.mrf.mxu0
        %v740 = vadd.f32 0.0, %v739
        %741 = vdwg.mxu0
        %742 = vmatpush.msra.mxu0 %v700
        %743 = vmatpush.msra.mxu0 %v696
        %744 = vmatpush.msra.mxu0 %v692
        %745 = vmatpush.msra.mxu0 %v688
        %746 = vmatpush.msra.mxu0 %v684
        %747 = vmatpush.msra.mxu0 %v680
        %748 = vmatpush.msra.mxu0 %v676
        %749 = vmatpush.msra.mxu0 %v672
        %750 = vmatpush.msra.mxu0 %v668
        %751 = vmatpush.msra.mxu0 %v664
        %752 = vmatpush.msra.mxu0 %v660
        %753 = vmatpush.msra.mxu0 %v656
        %754 = vmatpush.msra.mxu0 %v652
        %755 = vmatpush.msra.mxu0 %v648
        %756 = vmatpush.msra.mxu0 %v644
        %757 = vmatpush.msra.mxu0 %v640
        %758 = vmatmul.f32.gmra.mxu0 %v632
        %v759 = vpop.f32.mrf.mxu0
        %v760 = vadd.f32 0.0, %v759
        %761 = vdwg.mxu0
        %762 = vmatpush.msra.mxu0 %v701
        %763 = vmatpush.msra.mxu0 %v697
        %764 = vmatpush.msra.mxu0 %v693
        %765 = vmatpush.msra.mxu0 %v689
        %766 = vmatpush.msra.mxu0 %v685
        %767 = vmatpush.msra.mxu0 %v681
        %768 = vmatpush.msra.mxu0 %v677
        %769 = vmatpush.msra.mxu0 %v673
        %770 = vmatpush.msra.mxu0 %v669
        %771 = vmatpush.msra.mxu0 %v665
        %772 = vmatpush.msra.mxu0 %v661
        %773 = vmatpush.msra.mxu0 %v657
        %774 = vmatpush.msra.mxu0 %v653
        %775 = vmatpush.msra.mxu0 %v649
        %776 = vmatpush.msra.mxu0 %v645
        %777 = vmatpush.msra.mxu0 %v641
        %778 = vmatmul.f32.gmra.mxu0 %v632
        %v779 = vpop.f32.mrf.mxu0
        %v780 = vadd.f32 0.0, %v779
        %781 = vdwg.mxu0
        %v786 = vrot.slane %v740, 7
        %v787 = vrot.slane %v760, 6
        %v788 = vrot.slane %v780, 5
        %v789 = vsel %vm386, %v720, %v786
        %v790 = vsel %vm388, %v787, %v788
        %v791 = vsel %vm390, %v789, %v790
        %v793 = vadd.f32 %v637, %v791
        %v794 = vxor.u32 %v793, 2147483648
        %v795 = vmul.f32 %v794, 1.442695
        %v796 = vpow.pop %v795
        %v797 = vadd.f32 %v796, 1.0
        %v798 = vrcp.pop %v797
        %v799 = vmul.f32 %v797, %v798
        %v800 = vsub.f32 1.0, %v799
        %v801 = vmul.f32 %v798, %v800
        %v802 = vadd.f32 %v798, %v801
        %vm803 = vweird.f32 %v797
        %vm804 = vweird.f32 %v798
        %vm805 = vmor %vm803, %vm804
        %v806 = vsel %vm805, %v798, %v802
        %v807 = vand.u32 2147483647, %v797
        %vm808 = vcmp.eq.f32.partialorder %v807, 8.507059e+37
        %v809 = vand.u32 %v797, 2147483648
        %v810 = vor.u32 1.1754944e-38, %v809
        %v811 = vsel %vm808, %v810, %v806
        %v812 = vmul.f32 1.0, %v811
        %v814 = vrot.slane %v793, 3
        %v816 = vtanh.pop %v814
        %v818 = vrot.slane %v812, 1
        %v820 = vmul.f32 %v818, %v633
        %v821 = vmul.f32 %v812, %v816
        %v822 = vadd.f32 %v820, %v821
        %v823 = vtanh.pop %v822
        %v824 = vrot.slane %v812, 2
        %v826 = vmul.f32 %v824, %v823
        %s827 = scalar_select %p635, 1, 0
        %v828 = vstv %s827
        %vm829 = vcmp.eq.s32.totalorder %v828, 1
        %v830 = vsel %vm829, %v826, 0.0
        %831 = vst [vmem:[%s221 + $0x2] sm:$0x1] %v830
        %v832 = vsel %vm829, %v826, %v632
        %v833 = vsel %vm829, %v822, %v633
        %s834 = sadd.s32 %s222, 3
        %p835 = scmp.lt.s32.totalorder %s834, 11
        %s836 = scalar_lea.vmem %s217, 3
        %v837 = vld [vmem:[%s836] ss:$8 sm:$0xf]
        %v838 = vld [vmem:[%s3] sm:$0xff]
        %v839 = vld [vmem:[%s3 + $0x8] sm:$0xff]
        %v840 = vld [vmem:[%s3 + $0x10] sm:$0xff]
        %v841 = vld [vmem:[%s3 + $0x18] sm:$0xff]
        %v842 = vld [vmem:[%s3 + $0x20] sm:$0xff]
        %v843 = vld [vmem:[%s3 + $0x28] sm:$0xff]
        %v844 = vld [vmem:[%s3 + $0x30] sm:$0xff]
        %v845 = vld [vmem:[%s3 + $0x38] sm:$0xff]
        %v846 = vld [vmem:[%s3 + $0x40] sm:$0xff]
        %v847 = vld [vmem:[%s3 + $0x48] sm:$0xff]
        %v848 = vld [vmem:[%s3 + $0x50] sm:$0xff]
        %v849 = vld [vmem:[%s3 + $0x58] sm:$0xff]
        %v850 = vld [vmem:[%s3 + $0x60] sm:$0xff]
        %v851 = vld [vmem:[%s3 + $0x68] sm:$0xff]
        %v852 = vld [vmem:[%s3 + $0x70] sm:$0xff]
        %v853 = vld [vmem:[%s3 + $0x78] sm:$0xff]
        %v854 = vld [vmem:[%s3 + $0x80] sm:$0xff]
        %v855 = vld [vmem:[%s3 + $0x88] sm:$0xff]
        %v856 = vld [vmem:[%s3 + $0x90] sm:$0xff]
        %v857 = vld [vmem:[%s3 + $0x98] sm:$0xff]
        %v858 = vld [vmem:[%s3 + $0xa0] sm:$0xff]
        %v859 = vld [vmem:[%s3 + $0xa8] sm:$0xff]
        %v860 = vld [vmem:[%s3 + $0xb0] sm:$0xff]
        %v861 = vld [vmem:[%s3 + $0xb8] sm:$0xff]
        %v862 = vld [vmem:[%s3 + $0xc0] sm:$0xff]
        %v863 = vld [vmem:[%s3 + $0xc8] sm:$0xff]
        %v864 = vld [vmem:[%s3 + $0xd0] sm:$0xff]
        %v865 = vld [vmem:[%s3 + $0xd8] sm:$0xff]
        %v866 = vld [vmem:[%s3 + $0xe0] sm:$0xff]
        %v867 = vld [vmem:[%s3 + $0xe8] sm:$0xff]
        %v868 = vld [vmem:[%s3 + $0xf0] sm:$0xff]
        %v869 = vld [vmem:[%s3 + $0xf8] sm:$0xff]
        %v870 = vld [vmem:[%s3 + $0x100] sm:$0xff]
        %v871 = vld [vmem:[%s3 + $0x108] sm:$0xff]
        %v872 = vld [vmem:[%s3 + $0x110] sm:$0xff]
        %v873 = vld [vmem:[%s3 + $0x118] sm:$0xff]
        %v874 = vld [vmem:[%s3 + $0x120] sm:$0xff]
        %v875 = vld [vmem:[%s3 + $0x128] sm:$0xff]
        %v876 = vld [vmem:[%s3 + $0x130] sm:$0xff]
        %v877 = vld [vmem:[%s3 + $0x138] sm:$0xff]
        %v878 = vld [vmem:[%s3 + $0x140] sm:$0xff]
        %v879 = vld [vmem:[%s3 + $0x148] sm:$0xff]
        %v880 = vld [vmem:[%s3 + $0x150] sm:$0xff]
        %v881 = vld [vmem:[%s3 + $0x158] sm:$0xff]
        %v882 = vld [vmem:[%s3 + $0x160] sm:$0xff]
        %v883 = vld [vmem:[%s3 + $0x168] sm:$0xff]
        %v884 = vld [vmem:[%s3 + $0x170] sm:$0xff]
        %v885 = vld [vmem:[%s3 + $0x178] sm:$0xff]
        %v886 = vld [vmem:[%s3 + $0x180] sm:$0xff]
        %v887 = vld [vmem:[%s3 + $0x188] sm:$0xff]
        %v888 = vld [vmem:[%s3 + $0x190] sm:$0xff]
        %v889 = vld [vmem:[%s3 + $0x198] sm:$0xff]
        %v890 = vld [vmem:[%s3 + $0x1a0] sm:$0xff]
        %v891 = vld [vmem:[%s3 + $0x1a8] sm:$0xff]
        %v892 = vld [vmem:[%s3 + $0x1b0] sm:$0xff]
        %v893 = vld [vmem:[%s3 + $0x1b8] sm:$0xff]
        %v894 = vld [vmem:[%s3 + $0x1c0] sm:$0xff]
        %v895 = vld [vmem:[%s3 + $0x1c8] sm:$0xff]
        %v896 = vld [vmem:[%s3 + $0x1d0] sm:$0xff]
        %v897 = vld [vmem:[%s3 + $0x1d8] sm:$0xff]
        %v898 = vld [vmem:[%s3 + $0x1e0] sm:$0xff]
        %v899 = vld [vmem:[%s3 + $0x1e8] sm:$0xff]
        %v900 = vld [vmem:[%s3 + $0x1f0] sm:$0xff]
        %v901 = vld [vmem:[%s3 + $0x1f8] sm:$0xff]
        %902 = vmatpush.msra.mxu0 %v898
        %903 = vmatpush.msra.mxu0 %v894
        %904 = vmatpush.msra.mxu0 %v890
        %905 = vmatpush.msra.mxu0 %v886
        %906 = vmatpush.msra.mxu0 %v882
        %907 = vmatpush.msra.mxu0 %v878
        %908 = vmatpush.msra.mxu0 %v874
        %909 = vmatpush.msra.mxu0 %v870
        %910 = vmatpush.msra.mxu0 %v866
        %911 = vmatpush.msra.mxu0 %v862
        %912 = vmatpush.msra.mxu0 %v858
        %913 = vmatpush.msra.mxu0 %v854
        %914 = vmatpush.msra.mxu0 %v850
        %915 = vmatpush.msra.mxu0 %v846
        %916 = vmatpush.msra.mxu0 %v842
        %917 = vmatpush.msra.mxu0 %v838
        %918 = vmatmul.f32.gmra.mxu0 %v832
        %v919 = vpop.f32.mrf.mxu0
        %v920 = vadd.f32 0.0, %v919
        %921 = vdwg.mxu0
        %922 = vmatpush.msra.mxu0 %v899
        %923 = vmatpush.msra.mxu0 %v895
        %924 = vmatpush.msra.mxu0 %v891
        %925 = vmatpush.msra.mxu0 %v887
        %926 = vmatpush.msra.mxu0 %v883
        %927 = vmatpush.msra.mxu0 %v879
        %928 = vmatpush.msra.mxu0 %v875
        %929 = vmatpush.msra.mxu0 %v871
        %930 = vmatpush.msra.mxu0 %v867
        %931 = vmatpush.msra.mxu0 %v863
        %932 = vmatpush.msra.mxu0 %v859
        %933 = vmatpush.msra.mxu0 %v855
        %934 = vmatpush.msra.mxu0 %v851
        %935 = vmatpush.msra.mxu0 %v847
        %936 = vmatpush.msra.mxu0 %v843
        %937 = vmatpush.msra.mxu0 %v839
        %938 = vmatmul.f32.gmra.mxu0 %v832
        %v939 = vpop.f32.mrf.mxu0
        %v940 = vadd.f32 0.0, %v939
        %941 = vdwg.mxu0
        %942 = vmatpush.msra.mxu0 %v900
        %943 = vmatpush.msra.mxu0 %v896
        %944 = vmatpush.msra.mxu0 %v892
        %945 = vmatpush.msra.mxu0 %v888
        %946 = vmatpush.msra.mxu0 %v884
        %947 = vmatpush.msra.mxu0 %v880
        %948 = vmatpush.msra.mxu0 %v876
        %949 = vmatpush.msra.mxu0 %v872
        %950 = vmatpush.msra.mxu0 %v868
        %951 = vmatpush.msra.mxu0 %v864
        %952 = vmatpush.msra.mxu0 %v860
        %953 = vmatpush.msra.mxu0 %v856
        %954 = vmatpush.msra.mxu0 %v852
        %955 = vmatpush.msra.mxu0 %v848
        %956 = vmatpush.msra.mxu0 %v844
        %957 = vmatpush.msra.mxu0 %v840
        %958 = vmatmul.f32.gmra.mxu0 %v832
        %v959 = vpop.f32.mrf.mxu0
        %v960 = vadd.f32 0.0, %v959
        %961 = vdwg.mxu0
        %962 = vmatpush.msra.mxu0 %v901
        %963 = vmatpush.msra.mxu0 %v897
        %964 = vmatpush.msra.mxu0 %v893
        %965 = vmatpush.msra.mxu0 %v889
        %966 = vmatpush.msra.mxu0 %v885
        %967 = vmatpush.msra.mxu0 %v881
        %968 = vmatpush.msra.mxu0 %v877
        %969 = vmatpush.msra.mxu0 %v873
        %970 = vmatpush.msra.mxu0 %v869
        %971 = vmatpush.msra.mxu0 %v865
        %972 = vmatpush.msra.mxu0 %v861
        %973 = vmatpush.msra.mxu0 %v857
        %974 = vmatpush.msra.mxu0 %v853
        %975 = vmatpush.msra.mxu0 %v849
        %976 = vmatpush.msra.mxu0 %v845
        %977 = vmatpush.msra.mxu0 %v841
        %978 = vmatmul.f32.gmra.mxu0 %v832
        %v979 = vpop.f32.mrf.mxu0
        %v980 = vadd.f32 0.0, %v979
        %981 = vdwg.mxu0
        %v986 = vrot.slane %v940, 7
        %v987 = vrot.slane %v960, 6
        %v988 = vrot.slane %v980, 5
        %v989 = vsel %vm386, %v920, %v986
        %v990 = vsel %vm388, %v987, %v988
        %v991 = vsel %vm390, %v989, %v990
        %v993 = vadd.f32 %v837, %v991
        %v994 = vxor.u32 %v993, 2147483648
        %v995 = vmul.f32 %v994, 1.442695
        %v996 = vpow.pop %v995
        %v997 = vadd.f32 %v996, 1.0
        %v998 = vrcp.pop %v997
        %v999 = vmul.f32 %v997, %v998
        %v1000 = vsub.f32 1.0, %v999
        %v1001 = vmul.f32 %v998, %v1000
        %v1002 = vadd.f32 %v998, %v1001
        %vm1003 = vweird.f32 %v997
        %vm1004 = vweird.f32 %v998
        %vm1005 = vmor %vm1003, %vm1004
        %v1006 = vsel %vm1005, %v998, %v1002
        %v1007 = vand.u32 2147483647, %v997
        %vm1008 = vcmp.eq.f32.partialorder %v1007, 8.507059e+37
        %v1009 = vand.u32 %v997, 2147483648
        %v1010 = vor.u32 1.1754944e-38, %v1009
        %v1011 = vsel %vm1008, %v1010, %v1006
        %v1012 = vmul.f32 1.0, %v1011
        %v1014 = vrot.slane %v993, 3
        %v1016 = vtanh.pop %v1014
        %v1018 = vrot.slane %v1012, 1
        %v1020 = vmul.f32 %v1018, %v833
        %v1021 = vmul.f32 %v1012, %v1016
        %v1022 = vadd.f32 %v1020, %v1021
        %v1023 = vtanh.pop %v1022
        %v1024 = vrot.slane %v1012, 2
        %v1026 = vmul.f32 %v1024, %v1023
        %s1027 = scalar_select %p835, 1, 0
        %v1028 = vstv %s1027
        %vm1029 = vcmp.eq.s32.totalorder %v1028, 1
        %v1030 = vsel %vm1029, %v1026, 0.0
        %1031 = vst [vmem:[%s221 + $0x3] sm:$0x1] %v1030
        %v1032 = vsel %vm1029, %v1026, %v832
        %v1033 = vsel %vm1029, %v1022, %v833
        %s1034 = sadd.s32 %s222, 4
        %p1035 = scmp.lt.s32.totalorder %s1034, 11
        %s1036 = scalar_lea.vmem %s217, 4
        %v1037 = vld [vmem:[%s1036] ss:$8 sm:$0xf]
        %v1038 = vld [vmem:[%s3] sm:$0xff]
        %v1039 = vld [vmem:[%s3 + $0x8] sm:$0xff]
        %v1040 = vld [vmem:[%s3 + $0x10] sm:$0xff]
        %v1041 = vld [vmem:[%s3 + $0x18] sm:$0xff]
        %v1042 = vld [vmem:[%s3 + $0x20] sm:$0xff]
        %v1043 = vld [vmem:[%s3 + $0x28] sm:$0xff]
        %v1044 = vld [vmem:[%s3 + $0x30] sm:$0xff]
        %v1045 = vld [vmem:[%s3 + $0x38] sm:$0xff]
        %v1046 = vld [vmem:[%s3 + $0x40] sm:$0xff]
        %v1047 = vld [vmem:[%s3 + $0x48] sm:$0xff]
        %v1048 = vld [vmem:[%s3 + $0x50] sm:$0xff]
        %v1049 = vld [vmem:[%s3 + $0x58] sm:$0xff]
        %v1050 = vld [vmem:[%s3 + $0x60] sm:$0xff]
        %v1051 = vld [vmem:[%s3 + $0x68] sm:$0xff]
        %v1052 = vld [vmem:[%s3 + $0x70] sm:$0xff]
        %v1053 = vld [vmem:[%s3 + $0x78] sm:$0xff]
        %v1054 = vld [vmem:[%s3 + $0x80] sm:$0xff]
        %v1055 = vld [vmem:[%s3 + $0x88] sm:$0xff]
        %v1056 = vld [vmem:[%s3 + $0x90] sm:$0xff]
        %v1057 = vld [vmem:[%s3 + $0x98] sm:$0xff]
        %v1058 = vld [vmem:[%s3 + $0xa0] sm:$0xff]
        %v1059 = vld [vmem:[%s3 + $0xa8] sm:$0xff]
        %v1060 = vld [vmem:[%s3 + $0xb0] sm:$0xff]
        %v1061 = vld [vmem:[%s3 + $0xb8] sm:$0xff]
        %v1062 = vld [vmem:[%s3 + $0xc0] sm:$0xff]
        %v1063 = vld [vmem:[%s3 + $0xc8] sm:$0xff]
        %v1064 = vld [vmem:[%s3 + $0xd0] sm:$0xff]
        %v1065 = vld [vmem:[%s3 + $0xd8] sm:$0xff]
        %v1066 = vld [vmem:[%s3 + $0xe0] sm:$0xff]
        %v1067 = vld [vmem:[%s3 + $0xe8] sm:$0xff]
        %v1068 = vld [vmem:[%s3 + $0xf0] sm:$0xff]
        %v1069 = vld [vmem:[%s3 + $0xf8] sm:$0xff]
        %v1070 = vld [vmem:[%s3 + $0x100] sm:$0xff]
        %v1071 = vld [vmem:[%s3 + $0x108] sm:$0xff]
        %v1072 = vld [vmem:[%s3 + $0x110] sm:$0xff]
        %v1073 = vld [vmem:[%s3 + $0x118] sm:$0xff]
        %v1074 = vld [vmem:[%s3 + $0x120] sm:$0xff]
        %v1075 = vld [vmem:[%s3 + $0x128] sm:$0xff]
        %v1076 = vld [vmem:[%s3 + $0x130] sm:$0xff]
        %v1077 = vld [vmem:[%s3 + $0x138] sm:$0xff]
        %v1078 = vld [vmem:[%s3 + $0x140] sm:$0xff]
        %v1079 = vld [vmem:[%s3 + $0x148] sm:$0xff]
        %v1080 = vld [vmem:[%s3 + $0x150] sm:$0xff]
        %v1081 = vld [vmem:[%s3 + $0x158] sm:$0xff]
        %v1082 = vld [vmem:[%s3 + $0x160] sm:$0xff]
        %v1083 = vld [vmem:[%s3 + $0x168] sm:$0xff]
        %v1084 = vld [vmem:[%s3 + $0x170] sm:$0xff]
        %v1085 = vld [vmem:[%s3 + $0x178] sm:$0xff]
        %v1086 = vld [vmem:[%s3 + $0x180] sm:$0xff]
        %v1087 = vld [vmem:[%s3 + $0x188] sm:$0xff]
        %v1088 = vld [vmem:[%s3 + $0x190] sm:$0xff]
        %v1089 = vld [vmem:[%s3 + $0x198] sm:$0xff]
        %v1090 = vld [vmem:[%s3 + $0x1a0] sm:$0xff]
        %v1091 = vld [vmem:[%s3 + $0x1a8] sm:$0xff]
        %v1092 = vld [vmem:[%s3 + $0x1b0] sm:$0xff]
        %v1093 = vld [vmem:[%s3 + $0x1b8] sm:$0xff]
        %v1094 = vld [vmem:[%s3 + $0x1c0] sm:$0xff]
        %v1095 = vld [vmem:[%s3 + $0x1c8] sm:$0xff]
        %v1096 = vld [vmem:[%s3 + $0x1d0] sm:$0xff]
        %v1097 = vld [vmem:[%s3 + $0x1d8] sm:$0xff]
        %v1098 = vld [vmem:[%s3 + $0x1e0] sm:$0xff]
        %v1099 = vld [vmem:[%s3 + $0x1e8] sm:$0xff]
        %v1100 = vld [vmem:[%s3 + $0x1f0] sm:$0xff]
        %v1101 = vld [vmem:[%s3 + $0x1f8] sm:$0xff]
        %1102 = vmatpush.msra.mxu0 %v1098
        %1103 = vmatpush.msra.mxu0 %v1094
        %1104 = vmatpush.msra.mxu0 %v1090
        %1105 = vmatpush.msra.mxu0 %v1086
        %1106 = vmatpush.msra.mxu0 %v1082
        %1107 = vmatpush.msra.mxu0 %v1078
        %1108 = vmatpush.msra.mxu0 %v1074
        %1109 = vmatpush.msra.mxu0 %v1070
        %1110 = vmatpush.msra.mxu0 %v1066
        %1111 = vmatpush.msra.mxu0 %v1062
        %1112 = vmatpush.msra.mxu0 %v1058
        %1113 = vmatpush.msra.mxu0 %v1054
        %1114 = vmatpush.msra.mxu0 %v1050
        %1115 = vmatpush.msra.mxu0 %v1046
        %1116 = vmatpush.msra.mxu0 %v1042
        %1117 = vmatpush.msra.mxu0 %v1038
        %1118 = vmatmul.f32.gmra.mxu0 %v1032
        %v1119 = vpop.f32.mrf.mxu0
        %v1120 = vadd.f32 0.0, %v1119
        %1121 = vdwg.mxu0
        %1122 = vmatpush.msra.mxu0 %v1099
        %1123 = vmatpush.msra.mxu0 %v1095
        %1124 = vmatpush.msra.mxu0 %v1091
        %1125 = vmatpush.msra.mxu0 %v1087
        %1126 = vmatpush.msra.mxu0 %v1083
        %1127 = vmatpush.msra.mxu0 %v1079
        %1128 = vmatpush.msra.mxu0 %v1075
        %1129 = vmatpush.msra.mxu0 %v1071
        %1130 = vmatpush.msra.mxu0 %v1067
        %1131 = vmatpush.msra.mxu0 %v1063
        %1132 = vmatpush.msra.mxu0 %v1059
        %1133 = vmatpush.msra.mxu0 %v1055
        %1134 = vmatpush.msra.mxu0 %v1051
        %1135 = vmatpush.msra.mxu0 %v1047
        %1136 = vmatpush.msra.mxu0 %v1043
        %1137 = vmatpush.msra.mxu0 %v1039
        %1138 = vmatmul.f32.gmra.mxu0 %v1032
        %v1139 = vpop.f32.mrf.mxu0
        %v1140 = vadd.f32 0.0, %v1139
        %1141 = vdwg.mxu0
        %1142 = vmatpush.msra.mxu0 %v1100
        %1143 = vmatpush.msra.mxu0 %v1096
        %1144 = vmatpush.msra.mxu0 %v1092
        %1145 = vmatpush.msra.mxu0 %v1088
        %1146 = vmatpush.msra.mxu0 %v1084
        %1147 = vmatpush.msra.mxu0 %v1080
        %1148 = vmatpush.msra.mxu0 %v1076
        %1149 = vmatpush.msra.mxu0 %v1072
        %1150 = vmatpush.msra.mxu0 %v1068
        %1151 = vmatpush.msra.mxu0 %v1064
        %1152 = vmatpush.msra.mxu0 %v1060
        %1153 = vmatpush.msra.mxu0 %v1056
        %1154 = vmatpush.msra.mxu0 %v1052
        %1155 = vmatpush.msra.mxu0 %v1048
        %1156 = vmatpush.msra.mxu0 %v1044
        %1157 = vmatpush.msra.mxu0 %v1040
        %1158 = vmatmul.f32.gmra.mxu0 %v1032
        %v1159 = vpop.f32.mrf.mxu0
        %v1160 = vadd.f32 0.0, %v1159
        %1161 = vdwg.mxu0
        %1162 = vmatpush.msra.mxu0 %v1101
        %1163 = vmatpush.msra.mxu0 %v1097
        %1164 = vmatpush.msra.mxu0 %v1093
        %1165 = vmatpush.msra.mxu0 %v1089
        %1166 = vmatpush.msra.mxu0 %v1085
        %1167 = vmatpush.msra.mxu0 %v1081
        %1168 = vmatpush.msra.mxu0 %v1077
        %1169 = vmatpush.msra.mxu0 %v1073
        %1170 = vmatpush.msra.mxu0 %v1069
        %1171 = vmatpush.msra.mxu0 %v1065
        %1172 = vmatpush.msra.mxu0 %v1061
        %1173 = vmatpush.msra.mxu0 %v1057
        %1174 = vmatpush.msra.mxu0 %v1053
        %1175 = vmatpush.msra.mxu0 %v1049
        %1176 = vmatpush.msra.mxu0 %v1045
        %1177 = vmatpush.msra.mxu0 %v1041
        %1178 = vmatmul.f32.gmra.mxu0 %v1032
        %v1179 = vpop.f32.mrf.mxu0
        %v1180 = vadd.f32 0.0, %v1179
        %1181 = vdwg.mxu0
        %v1186 = vrot.slane %v1140, 7
        %v1187 = vrot.slane %v1160, 6
        %v1188 = vrot.slane %v1180, 5
        %v1189 = vsel %vm386, %v1120, %v1186
        %v1190 = vsel %vm388, %v1187, %v1188
        %v1191 = vsel %vm390, %v1189, %v1190
        %v1193 = vadd.f32 %v1037, %v1191
        %v1194 = vxor.u32 %v1193, 2147483648
        %v1195 = vmul.f32 %v1194, 1.442695
        %v1196 = vpow.pop %v1195
        %v1197 = vadd.f32 %v1196, 1.0
        %v1198 = vrcp.pop %v1197
        %v1199 = vmul.f32 %v1197, %v1198
        %v1200 = vsub.f32 1.0, %v1199
        %v1201 = vmul.f32 %v1198, %v1200
        %v1202 = vadd.f32 %v1198, %v1201
        %vm1203 = vweird.f32 %v1197
        %vm1204 = vweird.f32 %v1198
        %vm1205 = vmor %vm1203, %vm1204
        %v1206 = vsel %vm1205, %v1198, %v1202
        %v1207 = vand.u32 2147483647, %v1197
        %vm1208 = vcmp.eq.f32.partialorder %v1207, 8.507059e+37
        %v1209 = vand.u32 %v1197, 2147483648
        %v1210 = vor.u32 1.1754944e-38, %v1209
        %v1211 = vsel %vm1208, %v1210, %v1206
        %v1212 = vmul.f32 1.0, %v1211
        %v1214 = vrot.slane %v1193, 3
        %v1216 = vtanh.pop %v1214
        %v1218 = vrot.slane %v1212, 1
        %v1220 = vmul.f32 %v1218, %v1033
        %v1221 = vmul.f32 %v1212, %v1216
        %v1222 = vadd.f32 %v1220, %v1221
        %v1223 = vtanh.pop %v1222
        %v1224 = vrot.slane %v1212, 2
        %v1226 = vmul.f32 %v1224, %v1223
        %s1227 = scalar_select %p1035, 1, 0
        %v1228 = vstv %s1227
        %vm1229 = vcmp.eq.s32.totalorder %v1228, 1
        %v1230 = vsel %vm1229, %v1226, 0.0
        %1231 = vst [vmem:[%s221 + $0x4] sm:$0x1] %v1230
        %v1232 = vsel %vm1229, %v1226, %v1032
        %v1233 = vsel %vm1229, %v1222, %v1033
        %s1234 = sadd.s32 %s222, 5
        %p1235 = scmp.lt.s32.totalorder %s1234, 11
        %s1236 = scalar_lea.vmem %s217, 5
        %v1237 = vld [vmem:[%s1236] ss:$8 sm:$0xf]
        %v1238 = vld [vmem:[%s3] sm:$0xff]
        %v1239 = vld [vmem:[%s3 + $0x8] sm:$0xff]
        %v1240 = vld [vmem:[%s3 + $0x10] sm:$0xff]
        %v1241 = vld [vmem:[%s3 + $0x18] sm:$0xff]
        %v1242 = vld [vmem:[%s3 + $0x20] sm:$0xff]
        %v1243 = vld [vmem:[%s3 + $0x28] sm:$0xff]
        %v1244 = vld [vmem:[%s3 + $0x30] sm:$0xff]
        %v1245 = vld [vmem:[%s3 + $0x38] sm:$0xff]
        %v1246 = vld [vmem:[%s3 + $0x40] sm:$0xff]
        %v1247 = vld [vmem:[%s3 + $0x48] sm:$0xff]
        %v1248 = vld [vmem:[%s3 + $0x50] sm:$0xff]
        %v1249 = vld [vmem:[%s3 + $0x58] sm:$0xff]
        %v1250 = vld [vmem:[%s3 + $0x60] sm:$0xff]
        %v1251 = vld [vmem:[%s3 + $0x68] sm:$0xff]
        %v1252 = vld [vmem:[%s3 + $0x70] sm:$0xff]
        %v1253 = vld [vmem:[%s3 + $0x78] sm:$0xff]
        %v1254 = vld [vmem:[%s3 + $0x80] sm:$0xff]
        %v1255 = vld [vmem:[%s3 + $0x88] sm:$0xff]
        %v1256 = vld [vmem:[%s3 + $0x90] sm:$0xff]
        %v1257 = vld [vmem:[%s3 + $0x98] sm:$0xff]
        %v1258 = vld [vmem:[%s3 + $0xa0] sm:$0xff]
        %v1259 = vld [vmem:[%s3 + $0xa8] sm:$0xff]
        %v1260 = vld [vmem:[%s3 + $0xb0] sm:$0xff]
        %v1261 = vld [vmem:[%s3 + $0xb8] sm:$0xff]
        %v1262 = vld [vmem:[%s3 + $0xc0] sm:$0xff]
        %v1263 = vld [vmem:[%s3 + $0xc8] sm:$0xff]
        %v1264 = vld [vmem:[%s3 + $0xd0] sm:$0xff]
        %v1265 = vld [vmem:[%s3 + $0xd8] sm:$0xff]
        %v1266 = vld [vmem:[%s3 + $0xe0] sm:$0xff]
        %v1267 = vld [vmem:[%s3 + $0xe8] sm:$0xff]
        %v1268 = vld [vmem:[%s3 + $0xf0] sm:$0xff]
        %v1269 = vld [vmem:[%s3 + $0xf8] sm:$0xff]
        %v1270 = vld [vmem:[%s3 + $0x100] sm:$0xff]
        %v1271 = vld [vmem:[%s3 + $0x108] sm:$0xff]
        %v1272 = vld [vmem:[%s3 + $0x110] sm:$0xff]
        %v1273 = vld [vmem:[%s3 + $0x118] sm:$0xff]
        %v1274 = vld [vmem:[%s3 + $0x120] sm:$0xff]
        %v1275 = vld [vmem:[%s3 + $0x128] sm:$0xff]
        %v1276 = vld [vmem:[%s3 + $0x130] sm:$0xff]
        %v1277 = vld [vmem:[%s3 + $0x138] sm:$0xff]
        %v1278 = vld [vmem:[%s3 + $0x140] sm:$0xff]
        %v1279 = vld [vmem:[%s3 + $0x148] sm:$0xff]
        %v1280 = vld [vmem:[%s3 + $0x150] sm:$0xff]
        %v1281 = vld [vmem:[%s3 + $0x158] sm:$0xff]
        %v1282 = vld [vmem:[%s3 + $0x160] sm:$0xff]
        %v1283 = vld [vmem:[%s3 + $0x168] sm:$0xff]
        %v1284 = vld [vmem:[%s3 + $0x170] sm:$0xff]
        %v1285 = vld [vmem:[%s3 + $0x178] sm:$0xff]
        %v1286 = vld [vmem:[%s3 + $0x180] sm:$0xff]
        %v1287 = vld [vmem:[%s3 + $0x188] sm:$0xff]
        %v1288 = vld [vmem:[%s3 + $0x190] sm:$0xff]
        %v1289 = vld [vmem:[%s3 + $0x198] sm:$0xff]
        %v1290 = vld [vmem:[%s3 + $0x1a0] sm:$0xff]
        %v1291 = vld [vmem:[%s3 + $0x1a8] sm:$0xff]
        %v1292 = vld [vmem:[%s3 + $0x1b0] sm:$0xff]
        %v1293 = vld [vmem:[%s3 + $0x1b8] sm:$0xff]
        %v1294 = vld [vmem:[%s3 + $0x1c0] sm:$0xff]
        %v1295 = vld [vmem:[%s3 + $0x1c8] sm:$0xff]
        %v1296 = vld [vmem:[%s3 + $0x1d0] sm:$0xff]
        %v1297 = vld [vmem:[%s3 + $0x1d8] sm:$0xff]
        %v1298 = vld [vmem:[%s3 + $0x1e0] sm:$0xff]
        %v1299 = vld [vmem:[%s3 + $0x1e8] sm:$0xff]
        %v1300 = vld [vmem:[%s3 + $0x1f0] sm:$0xff]
        %v1301 = vld [vmem:[%s3 + $0x1f8] sm:$0xff]
        %1302 = vmatpush.msra.mxu0 %v1298
        %1303 = vmatpush.msra.mxu0 %v1294
        %1304 = vmatpush.msra.mxu0 %v1290
        %1305 = vmatpush.msra.mxu0 %v1286
        %1306 = vmatpush.msra.mxu0 %v1282
        %1307 = vmatpush.msra.mxu0 %v1278
        %1308 = vmatpush.msra.mxu0 %v1274
        %1309 = vmatpush.msra.mxu0 %v1270
        %1310 = vmatpush.msra.mxu0 %v1266
        %1311 = vmatpush.msra.mxu0 %v1262
        %1312 = vmatpush.msra.mxu0 %v1258
        %1313 = vmatpush.msra.mxu0 %v1254
        %1314 = vmatpush.msra.mxu0 %v1250
        %1315 = vmatpush.msra.mxu0 %v1246
        %1316 = vmatpush.msra.mxu0 %v1242
        %1317 = vmatpush.msra.mxu0 %v1238
        %1318 = vmatmul.f32.gmra.mxu0 %v1232
        %v1319 = vpop.f32.mrf.mxu0
        %v1320 = vadd.f32 0.0, %v1319
        %1321 = vdwg.mxu0
        %1322 = vmatpush.msra.mxu0 %v1299
        %1323 = vmatpush.msra.mxu0 %v1295
        %1324 = vmatpush.msra.mxu0 %v1291
        %1325 = vmatpush.msra.mxu0 %v1287
        %1326 = vmatpush.msra.mxu0 %v1283
        %1327 = vmatpush.msra.mxu0 %v1279
        %1328 = vmatpush.msra.mxu0 %v1275
        %1329 = vmatpush.msra.mxu0 %v1271
        %1330 = vmatpush.msra.mxu0 %v1267
        %1331 = vmatpush.msra.mxu0 %v1263
        %1332 = vmatpush.msra.mxu0 %v1259
        %1333 = vmatpush.msra.mxu0 %v1255
        %1334 = vmatpush.msra.mxu0 %v1251
        %1335 = vmatpush.msra.mxu0 %v1247
        %1336 = vmatpush.msra.mxu0 %v1243
        %1337 = vmatpush.msra.mxu0 %v1239
        %1338 = vmatmul.f32.gmra.mxu0 %v1232
        %v1339 = vpop.f32.mrf.mxu0
        %v1340 = vadd.f32 0.0, %v1339
        %1341 = vdwg.mxu0
        %1342 = vmatpush.msra.mxu0 %v1300
        %1343 = vmatpush.msra.mxu0 %v1296
        %1344 = vmatpush.msra.mxu0 %v1292
        %1345 = vmatpush.msra.mxu0 %v1288
        %1346 = vmatpush.msra.mxu0 %v1284
        %1347 = vmatpush.msra.mxu0 %v1280
        %1348 = vmatpush.msra.mxu0 %v1276
        %1349 = vmatpush.msra.mxu0 %v1272
        %1350 = vmatpush.msra.mxu0 %v1268
        %1351 = vmatpush.msra.mxu0 %v1264
        %1352 = vmatpush.msra.mxu0 %v1260
        %1353 = vmatpush.msra.mxu0 %v1256
        %1354 = vmatpush.msra.mxu0 %v1252
        %1355 = vmatpush.msra.mxu0 %v1248
        %1356 = vmatpush.msra.mxu0 %v1244
        %1357 = vmatpush.msra.mxu0 %v1240
        %1358 = vmatmul.f32.gmra.mxu0 %v1232
        %v1359 = vpop.f32.mrf.mxu0
        %v1360 = vadd.f32 0.0, %v1359
        %1361 = vdwg.mxu0
        %1362 = vmatpush.msra.mxu0 %v1301
        %1363 = vmatpush.msra.mxu0 %v1297
        %1364 = vmatpush.msra.mxu0 %v1293
        %1365 = vmatpush.msra.mxu0 %v1289
        %1366 = vmatpush.msra.mxu0 %v1285
        %1367 = vmatpush.msra.mxu0 %v1281
        %1368 = vmatpush.msra.mxu0 %v1277
        %1369 = vmatpush.msra.mxu0 %v1273
        %1370 = vmatpush.msra.mxu0 %v1269
        %1371 = vmatpush.msra.mxu0 %v1265
        %1372 = vmatpush.msra.mxu0 %v1261
        %1373 = vmatpush.msra.mxu0 %v1257
        %1374 = vmatpush.msra.mxu0 %v1253
        %1375 = vmatpush.msra.mxu0 %v1249
        %1376 = vmatpush.msra.mxu0 %v1245
        %1377 = vmatpush.msra.mxu0 %v1241
        %1378 = vmatmul.f32.gmra.mxu0 %v1232
        %v1379 = vpop.f32.mrf.mxu0
        %v1380 = vadd.f32 0.0, %v1379
        %1381 = vdwg.mxu0
        %v1386 = vrot.slane %v1340, 7
        %v1387 = vrot.slane %v1360, 6
        %v1388 = vrot.slane %v1380, 5
        %v1389 = vsel %vm386, %v1320, %v1386
        %v1390 = vsel %vm388, %v1387, %v1388
        %v1391 = vsel %vm390, %v1389, %v1390
        %v1393 = vadd.f32 %v1237, %v1391
        %v1394 = vxor.u32 %v1393, 2147483648
        %v1395 = vmul.f32 %v1394, 1.442695
        %v1396 = vpow.pop %v1395
        %v1397 = vadd.f32 %v1396, 1.0
        %v1398 = vrcp.pop %v1397
        %v1399 = vmul.f32 %v1397, %v1398
        %v1400 = vsub.f32 1.0, %v1399
        %v1401 = vmul.f32 %v1398, %v1400
        %v1402 = vadd.f32 %v1398, %v1401
        %vm1403 = vweird.f32 %v1397
        %vm1404 = vweird.f32 %v1398
        %vm1405 = vmor %vm1403, %vm1404
        %v1406 = vsel %vm1405, %v1398, %v1402
        %v1407 = vand.u32 2147483647, %v1397
        %vm1408 = vcmp.eq.f32.partialorder %v1407, 8.507059e+37
        %v1409 = vand.u32 %v1397, 2147483648
        %v1410 = vor.u32 1.1754944e-38, %v1409
        %v1411 = vsel %vm1408, %v1410, %v1406
        %v1412 = vmul.f32 1.0, %v1411
        %v1414 = vrot.slane %v1393, 3
        %v1416 = vtanh.pop %v1414
        %v1418 = vrot.slane %v1412, 1
        %v1420 = vmul.f32 %v1418, %v1233
        %v1421 = vmul.f32 %v1412, %v1416
        %v1422 = vadd.f32 %v1420, %v1421
        %v1423 = vtanh.pop %v1422
        %v1424 = vrot.slane %v1412, 2
        %v1426 = vmul.f32 %v1424, %v1423
        %s1427 = scalar_select %p1235, 1, 0
        %v1428 = vstv %s1427
        %vm1429 = vcmp.eq.s32.totalorder %v1428, 1
        %v1430 = vsel %vm1429, %v1426, 0.0
        %1431 = vst [vmem:[%s221 + $0x5] sm:$0x1] %v1430
        %v1432 = vsel %vm1429, %v1426, %v1232
        %v1433 = vsel %vm1429, %v1422, %v1233
        %s1434 = sadd.s32 %s222, 6
        %p1435 = scmp.lt.s32.totalorder %s1434, 11
        %s1436 = scalar_lea.vmem %s217, 6
        %v1437 = vld [vmem:[%s1436] ss:$8 sm:$0xf]
        %v1438 = vld [vmem:[%s3] sm:$0xff]
        %v1439 = vld [vmem:[%s3 + $0x8] sm:$0xff]
        %v1440 = vld [vmem:[%s3 + $0x10] sm:$0xff]
        %v1441 = vld [vmem:[%s3 + $0x18] sm:$0xff]
        %v1442 = vld [vmem:[%s3 + $0x20] sm:$0xff]
        %v1443 = vld [vmem:[%s3 + $0x28] sm:$0xff]
        %v1444 = vld [vmem:[%s3 + $0x30] sm:$0xff]
        %v1445 = vld [vmem:[%s3 + $0x38] sm:$0xff]
        %v1446 = vld [vmem:[%s3 + $0x40] sm:$0xff]
        %v1447 = vld [vmem:[%s3 + $0x48] sm:$0xff]
        %v1448 = vld [vmem:[%s3 + $0x50] sm:$0xff]
        %v1449 = vld [vmem:[%s3 + $0x58] sm:$0xff]
        %v1450 = vld [vmem:[%s3 + $0x60] sm:$0xff]
        %v1451 = vld [vmem:[%s3 + $0x68] sm:$0xff]
        %v1452 = vld [vmem:[%s3 + $0x70] sm:$0xff]
        %v1453 = vld [vmem:[%s3 + $0x78] sm:$0xff]
        %v1454 = vld [vmem:[%s3 + $0x80] sm:$0xff]
        %v1455 = vld [vmem:[%s3 + $0x88] sm:$0xff]
        %v1456 = vld [vmem:[%s3 + $0x90] sm:$0xff]
        %v1457 = vld [vmem:[%s3 + $0x98] sm:$0xff]
        %v1458 = vld [vmem:[%s3 + $0xa0] sm:$0xff]
        %v1459 = vld [vmem:[%s3 + $0xa8] sm:$0xff]
        %v1460 = vld [vmem:[%s3 + $0xb0] sm:$0xff]
        %v1461 = vld [vmem:[%s3 + $0xb8] sm:$0xff]
        %v1462 = vld [vmem:[%s3 + $0xc0] sm:$0xff]
        %v1463 = vld [vmem:[%s3 + $0xc8] sm:$0xff]
        %v1464 = vld [vmem:[%s3 + $0xd0] sm:$0xff]
        %v1465 = vld [vmem:[%s3 + $0xd8] sm:$0xff]
        %v1466 = vld [vmem:[%s3 + $0xe0] sm:$0xff]
        %v1467 = vld [vmem:[%s3 + $0xe8] sm:$0xff]
        %v1468 = vld [vmem:[%s3 + $0xf0] sm:$0xff]
        %v1469 = vld [vmem:[%s3 + $0xf8] sm:$0xff]
        %v1470 = vld [vmem:[%s3 + $0x100] sm:$0xff]
        %v1471 = vld [vmem:[%s3 + $0x108] sm:$0xff]
        %v1472 = vld [vmem:[%s3 + $0x110] sm:$0xff]
        %v1473 = vld [vmem:[%s3 + $0x118] sm:$0xff]
        %v1474 = vld [vmem:[%s3 + $0x120] sm:$0xff]
        %v1475 = vld [vmem:[%s3 + $0x128] sm:$0xff]
        %v1476 = vld [vmem:[%s3 + $0x130] sm:$0xff]
        %v1477 = vld [vmem:[%s3 + $0x138] sm:$0xff]
        %v1478 = vld [vmem:[%s3 + $0x140] sm:$0xff]
        %v1479 = vld [vmem:[%s3 + $0x148] sm:$0xff]
        %v1480 = vld [vmem:[%s3 + $0x150] sm:$0xff]
        %v1481 = vld [vmem:[%s3 + $0x158] sm:$0xff]
        %v1482 = vld [vmem:[%s3 + $0x160] sm:$0xff]
        %v1483 = vld [vmem:[%s3 + $0x168] sm:$0xff]
        %v1484 = vld [vmem:[%s3 + $0x170] sm:$0xff]
        %v1485 = vld [vmem:[%s3 + $0x178] sm:$0xff]
        %v1486 = vld [vmem:[%s3 + $0x180] sm:$0xff]
        %v1487 = vld [vmem:[%s3 + $0x188] sm:$0xff]
        %v1488 = vld [vmem:[%s3 + $0x190] sm:$0xff]
        %v1489 = vld [vmem:[%s3 + $0x198] sm:$0xff]
        %v1490 = vld [vmem:[%s3 + $0x1a0] sm:$0xff]
        %v1491 = vld [vmem:[%s3 + $0x1a8] sm:$0xff]
        %v1492 = vld [vmem:[%s3 + $0x1b0] sm:$0xff]
        %v1493 = vld [vmem:[%s3 + $0x1b8] sm:$0xff]
        %v1494 = vld [vmem:[%s3 + $0x1c0] sm:$0xff]
        %v1495 = vld [vmem:[%s3 + $0x1c8] sm:$0xff]
        %v1496 = vld [vmem:[%s3 + $0x1d0] sm:$0xff]
        %v1497 = vld [vmem:[%s3 + $0x1d8] sm:$0xff]
        %v1498 = vld [vmem:[%s3 + $0x1e0] sm:$0xff]
        %v1499 = vld [vmem:[%s3 + $0x1e8] sm:$0xff]
        %v1500 = vld [vmem:[%s3 + $0x1f0] sm:$0xff]
        %v1501 = vld [vmem:[%s3 + $0x1f8] sm:$0xff]
        %1502 = vmatpush.msra.mxu0 %v1498
        %1503 = vmatpush.msra.mxu0 %v1494
        %1504 = vmatpush.msra.mxu0 %v1490
        %1505 = vmatpush.msra.mxu0 %v1486
        %1506 = vmatpush.msra.mxu0 %v1482
        %1507 = vmatpush.msra.mxu0 %v1478
        %1508 = vmatpush.msra.mxu0 %v1474
        %1509 = vmatpush.msra.mxu0 %v1470
        %1510 = vmatpush.msra.mxu0 %v1466
        %1511 = vmatpush.msra.mxu0 %v1462
        %1512 = vmatpush.msra.mxu0 %v1458
        %1513 = vmatpush.msra.mxu0 %v1454
        %1514 = vmatpush.msra.mxu0 %v1450
        %1515 = vmatpush.msra.mxu0 %v1446
        %1516 = vmatpush.msra.mxu0 %v1442
        %1517 = vmatpush.msra.mxu0 %v1438
        %1518 = vmatmul.f32.gmra.mxu0 %v1432
        %v1519 = vpop.f32.mrf.mxu0
        %v1520 = vadd.f32 0.0, %v1519
        %1521 = vdwg.mxu0
        %1522 = vmatpush.msra.mxu0 %v1499
        %1523 = vmatpush.msra.mxu0 %v1495
        %1524 = vmatpush.msra.mxu0 %v1491
        %1525 = vmatpush.msra.mxu0 %v1487
        %1526 = vmatpush.msra.mxu0 %v1483
        %1527 = vmatpush.msra.mxu0 %v1479
        %1528 = vmatpush.msra.mxu0 %v1475
        %1529 = vmatpush.msra.mxu0 %v1471
        %1530 = vmatpush.msra.mxu0 %v1467
        %1531 = vmatpush.msra.mxu0 %v1463
        %1532 = vmatpush.msra.mxu0 %v1459
        %1533 = vmatpush.msra.mxu0 %v1455
        %1534 = vmatpush.msra.mxu0 %v1451
        %1535 = vmatpush.msra.mxu0 %v1447
        %1536 = vmatpush.msra.mxu0 %v1443
        %1537 = vmatpush.msra.mxu0 %v1439
        %1538 = vmatmul.f32.gmra.mxu0 %v1432
        %v1539 = vpop.f32.mrf.mxu0
        %v1540 = vadd.f32 0.0, %v1539
        %1541 = vdwg.mxu0
        %1542 = vmatpush.msra.mxu0 %v1500
        %1543 = vmatpush.msra.mxu0 %v1496
        %1544 = vmatpush.msra.mxu0 %v1492
        %1545 = vmatpush.msra.mxu0 %v1488
        %1546 = vmatpush.msra.mxu0 %v1484
        %1547 = vmatpush.msra.mxu0 %v1480
        %1548 = vmatpush.msra.mxu0 %v1476
        %1549 = vmatpush.msra.mxu0 %v1472
        %1550 = vmatpush.msra.mxu0 %v1468
        %1551 = vmatpush.msra.mxu0 %v1464
        %1552 = vmatpush.msra.mxu0 %v1460
        %1553 = vmatpush.msra.mxu0 %v1456
        %1554 = vmatpush.msra.mxu0 %v1452
        %1555 = vmatpush.msra.mxu0 %v1448
        %1556 = vmatpush.msra.mxu0 %v1444
        %1557 = vmatpush.msra.mxu0 %v1440
        %1558 = vmatmul.f32.gmra.mxu0 %v1432
        %v1559 = vpop.f32.mrf.mxu0
        %v1560 = vadd.f32 0.0, %v1559
        %1561 = vdwg.mxu0
        %1562 = vmatpush.msra.mxu0 %v1501
        %1563 = vmatpush.msra.mxu0 %v1497
        %1564 = vmatpush.msra.mxu0 %v1493
        %1565 = vmatpush.msra.mxu0 %v1489
        %1566 = vmatpush.msra.mxu0 %v1485
        %1567 = vmatpush.msra.mxu0 %v1481
        %1568 = vmatpush.msra.mxu0 %v1477
        %1569 = vmatpush.msra.mxu0 %v1473
        %1570 = vmatpush.msra.mxu0 %v1469
        %1571 = vmatpush.msra.mxu0 %v1465
        %1572 = vmatpush.msra.mxu0 %v1461
        %1573 = vmatpush.msra.mxu0 %v1457
        %1574 = vmatpush.msra.mxu0 %v1453
        %1575 = vmatpush.msra.mxu0 %v1449
        %1576 = vmatpush.msra.mxu0 %v1445
        %1577 = vmatpush.msra.mxu0 %v1441
        %1578 = vmatmul.f32.gmra.mxu0 %v1432
        %v1579 = vpop.f32.mrf.mxu0
        %v1580 = vadd.f32 0.0, %v1579
        %1581 = vdwg.mxu0
        %v1586 = vrot.slane %v1540, 7
        %v1587 = vrot.slane %v1560, 6
        %v1588 = vrot.slane %v1580, 5
        %v1589 = vsel %vm386, %v1520, %v1586
        %v1590 = vsel %vm388, %v1587, %v1588
        %v1591 = vsel %vm390, %v1589, %v1590
        %v1593 = vadd.f32 %v1437, %v1591
        %v1594 = vxor.u32 %v1593, 2147483648
        %v1595 = vmul.f32 %v1594, 1.442695
        %v1596 = vpow.pop %v1595
        %v1597 = vadd.f32 %v1596, 1.0
        %v1598 = vrcp.pop %v1597
        %v1599 = vmul.f32 %v1597, %v1598
        %v1600 = vsub.f32 1.0, %v1599
        %v1601 = vmul.f32 %v1598, %v1600
        %v1602 = vadd.f32 %v1598, %v1601
        %vm1603 = vweird.f32 %v1597
        %vm1604 = vweird.f32 %v1598
        %vm1605 = vmor %vm1603, %vm1604
        %v1606 = vsel %vm1605, %v1598, %v1602
        %v1607 = vand.u32 2147483647, %v1597
        %vm1608 = vcmp.eq.f32.partialorder %v1607, 8.507059e+37
        %v1609 = vand.u32 %v1597, 2147483648
        %v1610 = vor.u32 1.1754944e-38, %v1609
        %v1611 = vsel %vm1608, %v1610, %v1606
        %v1612 = vmul.f32 1.0, %v1611
        %v1614 = vrot.slane %v1593, 3
        %v1616 = vtanh.pop %v1614
        %v1618 = vrot.slane %v1612, 1
        %v1620 = vmul.f32 %v1618, %v1433
        %v1621 = vmul.f32 %v1612, %v1616
        %v1622 = vadd.f32 %v1620, %v1621
        %v1623 = vtanh.pop %v1622
        %v1624 = vrot.slane %v1612, 2
        %v1626 = vmul.f32 %v1624, %v1623
        %s1627 = scalar_select %p1435, 1, 0
        %v1628 = vstv %s1627
        %vm1629 = vcmp.eq.s32.totalorder %v1628, 1
        %v1630 = vsel %vm1629, %v1626, 0.0
        %1631 = vst [vmem:[%s221 + $0x6] sm:$0x1] %v1630
        %v1632 = vsel %vm1629, %v1626, %v1432
        %v1633 = vsel %vm1629, %v1622, %v1433
        %s1634 = sadd.s32 %s222, 7
        %p1635 = scmp.lt.s32.totalorder %s1634, 11
        %s1636 = scalar_lea.vmem %s217, 7
        %v1637 = vld [vmem:[%s1636] ss:$8 sm:$0xf]
        %v1638 = vld [vmem:[%s3] sm:$0xff]
        %v1639 = vld [vmem:[%s3 + $0x8] sm:$0xff]
        %v1640 = vld [vmem:[%s3 + $0x10] sm:$0xff]
        %v1641 = vld [vmem:[%s3 + $0x18] sm:$0xff]
        %v1642 = vld [vmem:[%s3 + $0x20] sm:$0xff]
        %v1643 = vld [vmem:[%s3 + $0x28] sm:$0xff]
        %v1644 = vld [vmem:[%s3 + $0x30] sm:$0xff]
        %v1645 = vld [vmem:[%s3 + $0x38] sm:$0xff]
        %v1646 = vld [vmem:[%s3 + $0x40] sm:$0xff]
        %v1647 = vld [vmem:[%s3 + $0x48] sm:$0xff]
        %v1648 = vld [vmem:[%s3 + $0x50] sm:$0xff]
        %v1649 = vld [vmem:[%s3 + $0x58] sm:$0xff]
        %v1650 = vld [vmem:[%s3 + $0x60] sm:$0xff]
        %v1651 = vld [vmem:[%s3 + $0x68] sm:$0xff]
        %v1652 = vld [vmem:[%s3 + $0x70] sm:$0xff]
        %v1653 = vld [vmem:[%s3 + $0x78] sm:$0xff]
        %v1654 = vld [vmem:[%s3 + $0x80] sm:$0xff]
        %v1655 = vld [vmem:[%s3 + $0x88] sm:$0xff]
        %v1656 = vld [vmem:[%s3 + $0x90] sm:$0xff]
        %v1657 = vld [vmem:[%s3 + $0x98] sm:$0xff]
        %v1658 = vld [vmem:[%s3 + $0xa0] sm:$0xff]
        %v1659 = vld [vmem:[%s3 + $0xa8] sm:$0xff]
        %v1660 = vld [vmem:[%s3 + $0xb0] sm:$0xff]
        %v1661 = vld [vmem:[%s3 + $0xb8] sm:$0xff]
        %v1662 = vld [vmem:[%s3 + $0xc0] sm:$0xff]
        %v1663 = vld [vmem:[%s3 + $0xc8] sm:$0xff]
        %v1664 = vld [vmem:[%s3 + $0xd0] sm:$0xff]
        %v1665 = vld [vmem:[%s3 + $0xd8] sm:$0xff]
        %v1666 = vld [vmem:[%s3 + $0xe0] sm:$0xff]
        %v1667 = vld [vmem:[%s3 + $0xe8] sm:$0xff]
        %v1668 = vld [vmem:[%s3 + $0xf0] sm:$0xff]
        %v1669 = vld [vmem:[%s3 + $0xf8] sm:$0xff]
        %v1670 = vld [vmem:[%s3 + $0x100] sm:$0xff]
        %v1671 = vld [vmem:[%s3 + $0x108] sm:$0xff]
        %v1672 = vld [vmem:[%s3 + $0x110] sm:$0xff]
        %v1673 = vld [vmem:[%s3 + $0x118] sm:$0xff]
        %v1674 = vld [vmem:[%s3 + $0x120] sm:$0xff]
        %v1675 = vld [vmem:[%s3 + $0x128] sm:$0xff]
        %v1676 = vld [vmem:[%s3 + $0x130] sm:$0xff]
        %v1677 = vld [vmem:[%s3 + $0x138] sm:$0xff]
        %v1678 = vld [vmem:[%s3 + $0x140] sm:$0xff]
        %v1679 = vld [vmem:[%s3 + $0x148] sm:$0xff]
        %v1680 = vld [vmem:[%s3 + $0x150] sm:$0xff]
        %v1681 = vld [vmem:[%s3 + $0x158] sm:$0xff]
        %v1682 = vld [vmem:[%s3 + $0x160] sm:$0xff]
        %v1683 = vld [vmem:[%s3 + $0x168] sm:$0xff]
        %v1684 = vld [vmem:[%s3 + $0x170] sm:$0xff]
        %v1685 = vld [vmem:[%s3 + $0x178] sm:$0xff]
        %v1686 = vld [vmem:[%s3 + $0x180] sm:$0xff]
        %v1687 = vld [vmem:[%s3 + $0x188] sm:$0xff]
        %v1688 = vld [vmem:[%s3 + $0x190] sm:$0xff]
        %v1689 = vld [vmem:[%s3 + $0x198] sm:$0xff]
        %v1690 = vld [vmem:[%s3 + $0x1a0] sm:$0xff]
        %v1691 = vld [vmem:[%s3 + $0x1a8] sm:$0xff]
        %v1692 = vld [vmem:[%s3 + $0x1b0] sm:$0xff]
        %v1693 = vld [vmem:[%s3 + $0x1b8] sm:$0xff]
        %v1694 = vld [vmem:[%s3 + $0x1c0] sm:$0xff]
        %v1695 = vld [vmem:[%s3 + $0x1c8] sm:$0xff]
        %v1696 = vld [vmem:[%s3 + $0x1d0] sm:$0xff]
        %v1697 = vld [vmem:[%s3 + $0x1d8] sm:$0xff]
        %v1698 = vld [vmem:[%s3 + $0x1e0] sm:$0xff]
        %v1699 = vld [vmem:[%s3 + $0x1e8] sm:$0xff]
        %v1700 = vld [vmem:[%s3 + $0x1f0] sm:$0xff]
        %v1701 = vld [vmem:[%s3 + $0x1f8] sm:$0xff]
        %1702 = vmatpush.msra.mxu0 %v1698
        %1703 = vmatpush.msra.mxu0 %v1694
        %1704 = vmatpush.msra.mxu0 %v1690
        %1705 = vmatpush.msra.mxu0 %v1686
        %1706 = vmatpush.msra.mxu0 %v1682
        %1707 = vmatpush.msra.mxu0 %v1678
        %1708 = vmatpush.msra.mxu0 %v1674
        %1709 = vmatpush.msra.mxu0 %v1670
        %1710 = vmatpush.msra.mxu0 %v1666
        %1711 = vmatpush.msra.mxu0 %v1662
        %1712 = vmatpush.msra.mxu0 %v1658
        %1713 = vmatpush.msra.mxu0 %v1654
        %1714 = vmatpush.msra.mxu0 %v1650
        %1715 = vmatpush.msra.mxu0 %v1646
        %1716 = vmatpush.msra.mxu0 %v1642
        %1717 = vmatpush.msra.mxu0 %v1638
        %1718 = vmatmul.f32.gmra.mxu0 %v1632
        %v1719 = vpop.f32.mrf.mxu0
        %v1720 = vadd.f32 0.0, %v1719
        %1721 = vdwg.mxu0
        %1722 = vmatpush.msra.mxu0 %v1699
        %1723 = vmatpush.msra.mxu0 %v1695
        %1724 = vmatpush.msra.mxu0 %v1691
        %1725 = vmatpush.msra.mxu0 %v1687
        %1726 = vmatpush.msra.mxu0 %v1683
        %1727 = vmatpush.msra.mxu0 %v1679
        %1728 = vmatpush.msra.mxu0 %v1675
        %1729 = vmatpush.msra.mxu0 %v1671
        %1730 = vmatpush.msra.mxu0 %v1667
        %1731 = vmatpush.msra.mxu0 %v1663
        %1732 = vmatpush.msra.mxu0 %v1659
        %1733 = vmatpush.msra.mxu0 %v1655
        %1734 = vmatpush.msra.mxu0 %v1651
        %1735 = vmatpush.msra.mxu0 %v1647
        %1736 = vmatpush.msra.mxu0 %v1643
        %1737 = vmatpush.msra.mxu0 %v1639
        %1738 = vmatmul.f32.gmra.mxu0 %v1632
        %v1739 = vpop.f32.mrf.mxu0
        %v1740 = vadd.f32 0.0, %v1739
        %1741 = vdwg.mxu0
        %1742 = vmatpush.msra.mxu0 %v1700
        %1743 = vmatpush.msra.mxu0 %v1696
        %1744 = vmatpush.msra.mxu0 %v1692
        %1745 = vmatpush.msra.mxu0 %v1688
        %1746 = vmatpush.msra.mxu0 %v1684
        %1747 = vmatpush.msra.mxu0 %v1680
        %1748 = vmatpush.msra.mxu0 %v1676
        %1749 = vmatpush.msra.mxu0 %v1672
        %1750 = vmatpush.msra.mxu0 %v1668
        %1751 = vmatpush.msra.mxu0 %v1664
        %1752 = vmatpush.msra.mxu0 %v1660
        %1753 = vmatpush.msra.mxu0 %v1656
        %1754 = vmatpush.msra.mxu0 %v1652
        %1755 = vmatpush.msra.mxu0 %v1648
        %1756 = vmatpush.msra.mxu0 %v1644
        %1757 = vmatpush.msra.mxu0 %v1640
        %1758 = vmatmul.f32.gmra.mxu0 %v1632
        %v1759 = vpop.f32.mrf.mxu0
        %v1760 = vadd.f32 0.0, %v1759
        %1761 = vdwg.mxu0
        %1762 = vmatpush.msra.mxu0 %v1701
        %1763 = vmatpush.msra.mxu0 %v1697
        %1764 = vmatpush.msra.mxu0 %v1693
        %1765 = vmatpush.msra.mxu0 %v1689
        %1766 = vmatpush.msra.mxu0 %v1685
        %1767 = vmatpush.msra.mxu0 %v1681
        %1768 = vmatpush.msra.mxu0 %v1677
        %1769 = vmatpush.msra.mxu0 %v1673
        %1770 = vmatpush.msra.mxu0 %v1669
        %1771 = vmatpush.msra.mxu0 %v1665
        %1772 = vmatpush.msra.mxu0 %v1661
        %1773 = vmatpush.msra.mxu0 %v1657
        %1774 = vmatpush.msra.mxu0 %v1653
        %1775 = vmatpush.msra.mxu0 %v1649
        %1776 = vmatpush.msra.mxu0 %v1645
        %1777 = vmatpush.msra.mxu0 %v1641
        %1778 = vmatmul.f32.gmra.mxu0 %v1632
        %v1779 = vpop.f32.mrf.mxu0
        %v1780 = vadd.f32 0.0, %v1779
        %1781 = vdwg.mxu0
        %v1786 = vrot.slane %v1740, 7
        %v1787 = vrot.slane %v1760, 6
        %v1788 = vrot.slane %v1780, 5
        %v1789 = vsel %vm386, %v1720, %v1786
        %v1790 = vsel %vm388, %v1787, %v1788
        %v1791 = vsel %vm390, %v1789, %v1790
        %v1793 = vadd.f32 %v1637, %v1791
        %v1794 = vxor.u32 %v1793, 2147483648
        %v1795 = vmul.f32 %v1794, 1.442695
        %v1796 = vpow.pop %v1795
        %v1797 = vadd.f32 %v1796, 1.0
        %v1798 = vrcp.pop %v1797
        %v1799 = vmul.f32 %v1797, %v1798
        %v1800 = vsub.f32 1.0, %v1799
        %v1801 = vmul.f32 %v1798, %v1800
        %v1802 = vadd.f32 %v1798, %v1801
        %vm1803 = vweird.f32 %v1797
        %vm1804 = vweird.f32 %v1798
        %vm1805 = vmor %vm1803, %vm1804
        %v1806 = vsel %vm1805, %v1798, %v1802
        %v1807 = vand.u32 2147483647, %v1797
        %vm1808 = vcmp.eq.f32.partialorder %v1807, 8.507059e+37
        %v1809 = vand.u32 %v1797, 2147483648
        %v1810 = vor.u32 1.1754944e-38, %v1809
        %v1811 = vsel %vm1808, %v1810, %v1806
        %v1812 = vmul.f32 1.0, %v1811
        %v1814 = vrot.slane %v1793, 3
        %v1816 = vtanh.pop %v1814
        %v1818 = vrot.slane %v1812, 1
        %v1820 = vmul.f32 %v1818, %v1633
        %v1821 = vmul.f32 %v1812, %v1816
        %v1822 = vadd.f32 %v1820, %v1821
        %v1823 = vtanh.pop %v1822
        %v1824 = vrot.slane %v1812, 2
        %v1826 = vmul.f32 %v1824, %v1823
        %s1827 = scalar_select %p1635, 1, 0
        %v1828 = vstv %s1827
        %vm1829 = vcmp.eq.s32.totalorder %v1828, 1
        %v1830 = vsel %vm1829, %v1826, 0.0
        %1831 = vst [vmem:[%s221 + $0x7] sm:$0x1] %v1830
        %v1832 = vsel %vm1829, %v1826, %v1632
        %v1833 = vsel %vm1829, %v1822, %v1633
        %1834 = vst [vmem:[#allocation2] sm:$0x1] %v1832
        %1835 = vst [vmem:[#allocation3] sm:$0x1] %v1833
        %p1836 = scmp.eq.s32.totalorder %s18, 1
        // Predicated region
        $region41: #{encoder_rnn_encode.1} parent=35 // pred_check
          %p1837 = pneg %p1836
        $region42: #{encoder_rnn_encode.1} parent=35 // pred_check_branch
          %1839 = sbr.rel (%p1837) target = $region44
        $region43: #{encoder_rnn_encode.1} parent=35 // pred_region
          %1840 = vst [vmem:[#allocation4] sm:$0x1] %v1833
        $region44: #{encoder_rnn_encode.1} parent=35 // pred_fallthru
          _
        %p1841 = scmp.lt.s32.totalorder %s18, 1
        %s1842 = scalar_select %p1841, %s18, 1
        %s1843 = smul.addr %s1842, 8
        %s1844 = scalar_lea.vmem %s4, %s1843
        // Predicated region
        $region45: #{encoder_rnn_encode.1} parent=35 // pred_check
          %p1845 = pneg %p125
        $region46: #{encoder_rnn_encode.1} parent=35 // pred_check_branch
          %1847 = sbr.rel (%p1845) target = $region48
        $region47: #{encoder_rnn_encode.1} parent=35 // pred_region
          _
        $region48: #{encoder_rnn_encode.1} parent=35 // pred_fallthru
          _
        // Predicated region
        $region49: #{encoder_rnn_encode.1} parent=35 // pred_check
          %p1848 = pneg %p146
        $region50: #{encoder_rnn_encode.1} parent=35 // pred_check_branch
          %1850 = sbr.rel (%p1848) target = $region52
        $region51: #{encoder_rnn_encode.1} parent=35 // pred_region
          %1852 = vsyncadd [#allocation5], 0
          %s1854 = sshll.u32 [#allocation4], 4
          %s1855 = int_to_ptr.vmem [resolvable:$true] %s1854
          %s1856 = sshll.u32 %s5, 4
          %s1857 = int_to_ptr.hbm [resolvable:$true] %s1856
          %1859 = dma.vmem_to_hbm [thread:$0]  %s1855, 16, %s1857, [#allocation5]
        $region52: #{encoder_rnn_encode.1} parent=35 // pred_fallthru
          _
        // Predicated region
        $region53: #{encoder_rnn_encode.1} parent=35 // pred_check
          %p1860 = pneg %p146
        $region54: #{encoder_rnn_encode.1} parent=35 // pred_check_branch
          %1862 = sbr.rel (%p1860) target = $region56
        $region55: #{encoder_rnn_encode.1} parent=35 // pred_region
          %1864 = dma.done [#allocation5], 16
        $region56: #{encoder_rnn_encode.1} parent=35 // pred_fallthru
          _
      $region36: #{encoder_rnn_encode.1} parent=5 // pred_fallthru
        _
      %p1865 = scmp.le.s32.totalorder 2, %s13
      // Predicated region
      $region57: #{encoder_rnn_encode.1} parent=5 // pred_check
        %p1866 = pneg %p1865
      $region58: #{encoder_rnn_encode.1} parent=5 // pred_check_branch
        %1868 = sbr.rel (%p1866) target = $region60
      $region59: #{encoder_rnn_encode.1} parent=5 // pred_region
        %s1869 = ssub.s32 %s13, 2
        // Predicated region
        $region61: #{encoder_rnn_encode.1} parent=59 // pred_check
          %p1870 = pneg %p131
        $region62: #{encoder_rnn_encode.1} parent=59 // pred_check_branch
          %1872 = sbr.rel (%p1870) target = $region64
        $region63: #{encoder_rnn_encode.1} parent=59 // pred_region
          %p1873 = scmp.lt.s32.totalorder %s19, 1
          %s1874 = scalar_select %p1873, %s19, 1
          %s1875 = smul.addr %s1874, 8
          %s1876 = scalar_lea.vmem %s4, %s1875
        $region64: #{encoder_rnn_encode.1} parent=59 // pred_fallthru
          _
      $region60: #{encoder_rnn_encode.1} parent=5 // pred_fallthru
        _
    $region6: #{encoder_rnn_encode.1} parent=1 // loop_footer
      %s17 = sadd.s32 1, %s13
    $region7: #{encoder_rnn_encode.1} parent=1 // loop_footer_branch
      %12 = sbr.rel target = $region3
    $region8: #{encoder_rnn_encode.1} parent=1 // loop_exit
      _
    %1877 = vsyncpa [#allocation5], 1
    %s1878 = scalar_lea.sflag [#allocation5], 1
    %1879 = vsyncpa %s1878, 1

</llo_original>
